<compile_context>
chip_gen: v5e
topology: v5e:2x2
jax: 0.10.0
libtpu: 0.0.40
codegen_flags: <defaults>
</compile_context>

<pallas_src>
import math
import functools

import jax
import jax.numpy as jnp
from jax.experimental import pallas as pl
from jax.experimental.pallas import tpu as pltpu


def transformer_layer_kernel(
    sp_ref,                         # (H, 1)  f32  softplus(gammas)  (decay rate >= 0)
    q_ref, k_ref, v_ref,            # (tq,D) f32 ; (S,D) bf16 ; (S,D) bf16
    wq_ref, bq_ref,                 # (D,D) bf16 (pre-scaled by 1/sqrt(d_k)), (1,D) f32
    wk_ref, bk_ref,                 # (D,D) bf16, (1,D) f32
    wv_ref, bv_ref,                 # (D,D) bf16, (1,D) f32
    wo_ref, bo_ref,                 # (H,d_k,D) bf16, (1,D) f32
    ln1_g_ref, ln1_b_ref,           # (1,D) f32
    w1_ref, b1_ref,                 # (D,d_ff) bf16, (1,d_ff) f32
    w2_ref, b2_ref,                 # (d_ff,D) bf16, (1,D) f32
    ln2_g_ref, ln2_b_ref,           # (1,D) f32
    out_ref, att_ref,               # (tq,D) f32 ; (H,tq,S) att dtype
    kh_sc, vh_sc,                   # (H,S,d_k) bf16 scratch — K/V heads cached per batch
    *, n_heads, d_k, tq, seq_len,
):
    qi = pl.program_id(1)

    def split_heads(x):             # (N, D) f32 -> (H, N, d_k) bf16
        xb = x.astype(jnp.bfloat16)
        return jnp.concatenate(
            [xb[None, :, h * d_k:(h + 1) * d_k] for h in range(n_heads)],
            axis=0)

    # ---- K/V projection + head split: ONCE per batch (query axis is
    #      "arbitrary", so qi runs 0..n_q-1 in order for each batch index). ----
    @pl.when(qi == 0)
    def _():
        kp = jnp.dot(k_ref[...], wk_ref[...],
                     preferred_element_type=jnp.float32) + bk_ref[...]
        vp = jnp.dot(v_ref[...], wv_ref[...],
                     preferred_element_type=jnp.float32) + bv_ref[...]
        kh_sc[...] = split_heads(kp)
        vh_sc[...] = split_heads(vp)

    # ---- Q projection for this tile (1/sqrt(d_k) already folded into wq/bq). ----
    q_in = q_ref[...]                                      # (tq, D) f32
    qp = jnp.dot(q_in.astype(jnp.bfloat16), wq_ref[...],
                 preferred_element_type=jnp.float32) + bq_ref[...]
    qh = split_heads(qp)                                   # (H, tq, d_k)

    kh = kh_sc[...]                                        # (H, S, d_k)
    vh = vh_sc[...]                                        # (H, S, d_k)

    # scores[h,t,s] = <q[h,t,:], k[h,s,:]>  (one batched MXU stream).
    scores = jax.lax.dot_general(
        qh, kh, (((2,), (2,)), ((0,), (0,))),
        preferred_element_type=jnp.float32)                # (H, tq, S)

    # ---- decay + causal mask, generated in-kernel (zero extra DMA). ----
    row = qi * tq + jax.lax.broadcasted_iota(jnp.int32, (tq, seq_len), 0)
    col = jax.lax.broadcasted_iota(jnp.int32, (tq, seq_len), 1)
    dist = jnp.abs((row - col).astype(jnp.float32)) * (1.0 / 21.0)   # |i-j|/21
    # total_effect = clip(exp(+|i-j|/21 * softplus(gamma)), 1e-5, 1e5)
    te = jnp.clip(jnp.exp(dist[None, :, :] * sp_ref[...][:, :, None]),
                  1e-5, 1e5)                               # (H, tq, S)
    scores = scores * te
    scores = jnp.where((col <= row)[None, :, :], scores, -1e32)   # masked_fill

    # ---- numerically stable softmax along keys (divide on the EUP). ----
    m = jnp.max(scores, axis=-1, keepdims=True)
    e = jnp.exp(scores - m)
    denom = jnp.sum(e, axis=-1, keepdims=True)
    probs = (e * pl.reciprocal(denom, approx=True)).astype(jnp.bfloat16)

    att_ref[...] = probs.astype(att_ref.dtype)             # single full-block store

    head_out = jax.lax.dot_general(
        probs, vh, (((2,), (1,)), ((0,), (0,))),
        preferred_element_type=jnp.float32)                # (H, tq, d_k)

    # Output projection with per-head (d_k, D) weight blocks + reduce over heads
    # (avoids a lane-axis concat of the head outputs).
    # TODO(synk): merge heads into one (tq,D)@(D,D) matmul (full MXU width on
    # v6e/v7x) once the (H,tq,d_k)->(tq,D) lane-merge relayout is verified to
    # lower cleanly in Mosaic.
    proj = jax.lax.dot_general(
        head_out.astype(jnp.bfloat16), wo_ref[...],
        (((2,), (1,)), ((0,), (0,))),
        preferred_element_type=jnp.float32)                # (H, tq, D)
    attn_out = jnp.sum(proj, axis=0) + bo_ref[...]         # (tq, D)

    # residual + LayerNorm1 (biased variance, eps = 1e-5)
    x = q_in + attn_out
    mu = jnp.mean(x, axis=-1, keepdims=True)
    var = jnp.mean((x - mu) ** 2, axis=-1, keepdims=True)
    x = (x - mu) * jax.lax.rsqrt(var + 1e-5) * ln1_g_ref[...] + ln1_b_ref[...]

    # position-wise FFN: linear1 -> ReLU -> (dropout = id) -> linear2
    h1 = jnp.dot(x.astype(jnp.bfloat16), w1_ref[...],
                 preferred_element_type=jnp.float32) + b1_ref[...]
    h1 = jnp.maximum(h1, 0.0)
    ffn = jnp.dot(h1.astype(jnp.bfloat16), w2_ref[...],
                  preferred_element_type=jnp.float32) + b2_ref[...]

    # residual + LayerNorm2
    y = x + ffn
    mu2 = jnp.mean(y, axis=-1, keepdims=True)
    var2 = jnp.mean((y - mu2) ** 2, axis=-1, keepdims=True)
    y = (y - mu2) * jax.lax.rsqrt(var2 + 1e-5) * ln2_g_ref[...] + ln2_b_ref[...]

    out_ref[...] = y


def _pick_query_tile(S):
    for t in (128, 64, 32, 16, 8):
        if S % t == 0:
            return t
    # TODO(synk): handle S not divisible by 8 with a cdiv grid + masked
    # remainder tile instead of one full-sequence tile.
    return S


def transformer_layer(query, key, values, params, n_heads,
                      att_dtype=jnp.bfloat16):
    bs, S, D = query.shape
    d_k = D // n_heads
    d_ff = params["w1"].shape[1]

    tq = _pick_query_tile(S)
    n_q = S // tq

    inv_sqrt_dk = 1.0 / math.sqrt(d_k)

    # MXU operands in bf16 (accumulation stays f32 inside the kernel).
    wk = params["wk"].astype(jnp.bfloat16)
    wq = (params["wk"] * inv_sqrt_dk).astype(jnp.bfloat16)   # 1/sqrt(d_k) folded in
    bq = (params["bk"] * inv_sqrt_dk).astype(jnp.float32)
    wv = params["wv"].astype(jnp.bfloat16)
    wo_r = params["wo"].reshape(n_heads, d_k, D).astype(jnp.bfloat16)
    w1 = params["w1"].astype(jnp.bfloat16)
    w2 = params["w2"].astype(jnp.bfloat16)

    # Per-head decay rate softplus(gamma) >= 0  (decay = exp(+|i-j|/21 * sp)).
    sp = jax.nn.softplus(params["gammas"]).reshape(n_heads, 1).astype(jnp.float32)

    # K/V are only consumed through bf16 MXU ops -> halve their HBM traffic.
    key_b = key.astype(jnp.bfloat16)
    values_b = values.astype(jnp.bfloat16)

    def const_spec(shape):
        nd = len(shape)
        return pl.BlockSpec(shape, lambda b, i: (0,) * nd)

    in_specs = [
        const_spec((n_heads, 1)),                                 # softplus(gamma)
        pl.BlockSpec((None, tq, D), lambda b, i: (b, i, 0)),      # query (f32)
        pl.BlockSpec((None, S, D), lambda b, i: (b, 0, 0)),       # key   (bf16)
        pl.BlockSpec((None, S, D), lambda b, i: (b, 0, 0)),       # values(bf16)
        const_spec((D, D)), const_spec((1, D)),                   # wq, bq (pre-scaled)
        const_spec((D, D)), const_spec((1, D)),                   # k_linear
        const_spec((D, D)), const_spec((1, D)),                   # v_linear
        const_spec((n_heads, d_k, D)), const_spec((1, D)),        # out_proj
        const_spec((1, D)), const_spec((1, D)),                   # layer_norm1
        const_spec((D, d_ff)), const_spec((1, d_ff)),             # linear1
        const_spec((d_ff, D)), const_spec((1, D)),                # linear2
        const_spec((1, D)), const_spec((1, D)),                   # layer_norm2
    ]
    out_specs = (
        pl.BlockSpec((None, tq, D), lambda b, i: (b, i, 0)),
        pl.BlockSpec((None, n_heads, tq, S), lambda b, i: (b, 0, i, 0)),
    )
    out_shape = (
        jax.ShapeDtypeStruct((bs, S, D), jnp.float32),
        jax.ShapeDtypeStruct((bs, n_heads, S, S), att_dtype),
    )

    # VMEM limit ~= 75% of physical per-core VMEM (v5e/v6e 128 MiB -> 96 MiB,
    # v7x 64 MiB -> 48 MiB), never below the 32 MiB scoped default.
    try:
        vmem_cap = pltpu.get_tpu_info().vmem_capacity_bytes
    except Exception:
        vmem_cap = 64 << 20
    vmem_limit = max(32 << 20, min(int(vmem_cap * 0.75), 100 << 20))

    kernel = functools.partial(transformer_layer_kernel,
                               n_heads=n_heads, d_k=d_k, tq=tq, seq_len=S)
    return pl.pallas_call(
        kernel,
        grid=(bs, n_q),
        in_specs=in_specs,
        out_specs=out_specs,
        out_shape=out_shape,
        scratch_shapes=[
            pltpu.VMEM((n_heads, S, d_k), jnp.bfloat16),   # cached K heads
            pltpu.VMEM((n_heads, S, d_k), jnp.bfloat16),   # cached V heads
        ],
        compiler_params=pltpu.CompilerParams(
            dimension_semantics=("parallel", "arbitrary"),
            vmem_limit_bytes=vmem_limit),
    )(sp, query, key_b, values_b,
      wq, bq, wk, params["bk"], wv, params["bv"],
      wo_r, params["bo"],
      params["ln1_g"], params["ln1_b"],
      w1, params["b1"], w2, params["b2"],
      params["ln2_g"], params["ln2_b"])


def init_params(rng, d_model, d_ff, n_heads):
    """Deterministic synthetic init mirroring the module's parameter shapes."""
    ks = jax.random.split(rng, 8)

    def xavier(key, shape):
        fan_in, fan_out = shape[0], shape[1]
        bound = math.sqrt(6.0 / (fan_in + fan_out))
        return jax.random.uniform(key, shape, jnp.float32, -bound, bound)

    params = {
        # Linear weights stored as (in, out) so the kernel does x @ W + b.
        "wk": xavier(ks[0], (d_model, d_model)),
        "bk": jnp.zeros((1, d_model), jnp.float32),          # constant_(bias, 0)
        "wv": xavier(ks[1], (d_model, d_model)),
        "bv": jnp.zeros((1, d_model), jnp.float32),
        "gammas": jax.random.uniform(ks[2], (n_heads, 1, 1), jnp.float32,
                                     -1.0, 1.0),
        "wo": xavier(ks[3], (d_model, d_model)),
        "bo": jnp.zeros((1, d_model), jnp.float32),
        "ln1_g": jnp.ones((1, d_model), jnp.float32),
        "ln1_b": jnp.zeros((1, d_model), jnp.float32),
        "w1": xavier(ks[4], (d_model, d_ff)),
        "b1": jax.random.uniform(ks[5], (1, d_ff), jnp.float32, -0.05, 0.05),
        "w2": xavier(ks[6], (d_ff, d_model)),
        "b2": jax.random.uniform(ks[7], (1, d_model), jnp.float32, -0.05, 0.05),
        "ln2_g": jnp.ones((1, d_model), jnp.float32),
        "ln2_b": jnp.zeros((1, d_model), jnp.float32),
    }
    return params


if __name__ == "__main__":
    bs, seqlen, d_model, n_heads, d_ff = 2, 8, 32, 4, 64

    root = jax.random.PRNGKey(0)
    k_q, k_k, k_v, k_p = jax.random.split(root, 4)

    query = jax.random.normal(k_q, (bs, seqlen, d_model), jnp.float32)
    key_t = jax.random.normal(k_k, (bs, seqlen, d_model), jnp.float32)
    values = jax.random.normal(k_v, (bs, seqlen, d_model), jnp.float32)

    params = init_params(k_p, d_model, d_ff, n_heads)

    out, att_weight = transformer_layer(query, key_t, values, params, n_heads)
    jax.block_until_ready((out, att_weight))

    assert out.shape == (bs, seqlen, d_model)
    assert att_weight.shape == (bs, n_heads, seqlen, seqlen)
    assert bool(jnp.all(jnp.isfinite(out)))
    print("KERNEL_OK")
</pallas_src>

<mosaic_0001>
module attributes {stable_mosaic.version = 11 : i64} {
  func.func @transformer_layer_kernel(%arg0: i32, %arg1: i32, %arg2: memref<4x1xf32, #tpu.memory_space<vmem>>, %arg3: memref<1x8x32xf32, #tpu.memory_space<vmem>>, %arg4: memref<1x8x32xbf16, #tpu.memory_space<vmem>>, %arg5: memref<1x8x32xbf16, #tpu.memory_space<vmem>>, %arg6: memref<32x32xbf16, #tpu.memory_space<vmem>>, %arg7: memref<1x32xf32, #tpu.memory_space<vmem>>, %arg8: memref<32x32xbf16, #tpu.memory_space<vmem>>, %arg9: memref<1x32xf32, #tpu.memory_space<vmem>>, %arg10: memref<32x32xbf16, #tpu.memory_space<vmem>>, %arg11: memref<1x32xf32, #tpu.memory_space<vmem>>, %arg12: memref<4x8x32xbf16, #tpu.memory_space<vmem>>, %arg13: memref<1x32xf32, #tpu.memory_space<vmem>>, %arg14: memref<1x32xf32, #tpu.memory_space<vmem>>, %arg15: memref<1x32xf32, #tpu.memory_space<vmem>>, %arg16: memref<32x64xbf16, #tpu.memory_space<vmem>>, %arg17: memref<1x64xf32, #tpu.memory_space<vmem>>, %arg18: memref<64x32xbf16, #tpu.memory_space<vmem>>, %arg19: memref<1x32xf32, #tpu.memory_space<vmem>>, %arg20: memref<1x32xf32, #tpu.memory_space<vmem>>, %arg21: memref<1x32xf32, #tpu.memory_space<vmem>>, %arg22: memref<1x8x32xf32, #tpu.memory_space<vmem>>, %arg23: memref<1x4x8x8xbf16, #tpu.memory_space<vmem>>, %arg24: memref<4x8x8xbf16, #tpu.memory_space<vmem>>, %arg25: memref<4x8x8xbf16, #tpu.memory_space<vmem>>) attributes {dimension_semantics = [#tpu.dimension_semantics<parallel>, #tpu.dimension_semantics<arbitrary>], iteration_bounds = array<i64: 2, 1>, scalar_prefetch = 0 : i64, scratch_operands = 2 : i64, tpu.core_type = #tpu.core_type<tc>, window_params = [{pipeline_mode = #tpu.pipeline_mode<synchronous>, transform_indices = @transform_0, window_bounds = array<i64: 4, 1>}, {transform_indices = @transform_1, window_bounds = array<i64: 1, 8, 32>}, {transform_indices = @transform_2, window_bounds = array<i64: 1, 8, 32>}, {transform_indices = @transform_3, window_bounds = array<i64: 1, 8, 32>}, {pipeline_mode = #tpu.pipeline_mode<synchronous>, transform_indices = @transform_4, window_bounds = array<i64: 32, 32>}, {pipeline_mode = #tpu.pipeline_mode<synchronous>, transform_indices = @transform_5, window_bounds = array<i64: 1, 32>}, {pipeline_mode = #tpu.pipeline_mode<synchronous>, transform_indices = @transform_6, window_bounds = array<i64: 32, 32>}, {pipeline_mode = #tpu.pipeline_mode<synchronous>, transform_indices = @transform_7, window_bounds = array<i64: 1, 32>}, {pipeline_mode = #tpu.pipeline_mode<synchronous>, transform_indices = @transform_8, window_bounds = array<i64: 32, 32>}, {pipeline_mode = #tpu.pipeline_mode<synchronous>, transform_indices = @transform_9, window_bounds = array<i64: 1, 32>}, {pipeline_mode = #tpu.pipeline_mode<synchronous>, transform_indices = @transform_10, window_bounds = array<i64: 4, 8, 32>}, {pipeline_mode = #tpu.pipeline_mode<synchronous>, transform_indices = @transform_11, window_bounds = array<i64: 1, 32>}, {pipeline_mode = #tpu.pipeline_mode<synchronous>, transform_indices = @transform_12, window_bounds = array<i64: 1, 32>}, {pipeline_mode = #tpu.pipeline_mode<synchronous>, transform_indices = @transform_13, window_bounds = array<i64: 1, 32>}, {pipeline_mode = #tpu.pipeline_mode<synchronous>, transform_indices = @transform_14, window_bounds = array<i64: 32, 64>}, {pipeline_mode = #tpu.pipeline_mode<synchronous>, transform_indices = @transform_15, window_bounds = array<i64: 1, 64>}, {pipeline_mode = #tpu.pipeline_mode<synchronous>, transform_indices = @transform_16, window_bounds = array<i64: 64, 32>}, {pipeline_mode = #tpu.pipeline_mode<synchronous>, transform_indices = @transform_17, window_bounds = array<i64: 1, 32>}, {pipeline_mode = #tpu.pipeline_mode<synchronous>, transform_indices = @transform_18, window_bounds = array<i64: 1, 32>}, {pipeline_mode = #tpu.pipeline_mode<synchronous>, transform_indices = @transform_19, window_bounds = array<i64: 1, 32>}, {transform_indices = @transform_20, window_bounds = array<i64: 1, 8, 32>}, {transform_indices = @transform_21, window_bounds = array<i64: 1, 4, 8, 8>}]} {
    %c0_i32 = arith.constant 0 : i32
    %0 = arith.cmpi eq, %arg1, %c0_i32 : i32
    %1 = arith.extui %0 : i1 to i32
    %c0_i32_0 = arith.constant 0 : i32
    %2 = arith.cmpi ne, %1, %c0_i32_0 : i32
    scf.if %2 {
      %c0_66 = arith.constant 0 : index
      %c0_67 = arith.constant 0 : index
      %c0_68 = arith.constant 0 : index
      %141 = vector.load %arg4[%c0_66, %c0_67, %c0_68] : memref<1x8x32xbf16, #tpu.memory_space<vmem>>, vector<1x8x32xbf16>
      %142 = vector.shape_cast %141 : vector<1x8x32xbf16> to vector<8x32xbf16>
      %c0_69 = arith.constant 0 : index
      %c0_70 = arith.constant 0 : index
      %143 = vector.load %arg8[%c0_69, %c0_70] : memref<32x32xbf16, #tpu.memory_space<vmem>>, vector<32x32xbf16>
      %cst_71 = arith.constant dense<0.000000e+00> : vector<8x32xf32>
      %144 = tpu.matmul %142, %143, %cst_71 {dimension_numbers = #tpu.dot_dimension_numbers<[1], [0], [0], [1], [0, 0, 1, 1], [], []>} : vector<8x32xbf16>, vector<32x32xbf16>, vector<8x32xf32> -> vector<8x32xf32>
      %c0_72 = arith.constant 0 : index
      %c0_73 = arith.constant 0 : index
      %145 = vector.load %arg9[%c0_72, %c0_73] : memref<1x32xf32, #tpu.memory_space<vmem>>, vector<1x32xf32>
      %146 = vector.broadcast %145 : vector<1x32xf32> to vector<8x32xf32>
      %147 = arith.addf %144, %146 : vector<8x32xf32>
      %c0_74 = arith.constant 0 : index
      %c0_75 = arith.constant 0 : index
      %c0_76 = arith.constant 0 : index
      %148 = vector.load %arg5[%c0_74, %c0_75, %c0_76] : memref<1x8x32xbf16, #tpu.memory_space<vmem>>, vector<1x8x32xbf16>
      %149 = vector.shape_cast %148 : vector<1x8x32xbf16> to vector<8x32xbf16>
      %c0_77 = arith.constant 0 : index
      %c0_78 = arith.constant 0 : index
      %150 = vector.load %arg10[%c0_77, %c0_78] : memref<32x32xbf16, #tpu.memory_space<vmem>>, vector<32x32xbf16>
      %cst_79 = arith.constant dense<0.000000e+00> : vector<8x32xf32>
      %151 = tpu.matmul %149, %150, %cst_79 {dimension_numbers = #tpu.dot_dimension_numbers<[1], [0], [0], [1], [0, 0, 1, 1], [], []>} : vector<8x32xbf16>, vector<32x32xbf16>, vector<8x32xf32> -> vector<8x32xf32>
      %c0_80 = arith.constant 0 : index
      %c0_81 = arith.constant 0 : index
      %152 = vector.load %arg11[%c0_80, %c0_81] : memref<1x32xf32, #tpu.memory_space<vmem>>, vector<1x32xf32>
      %153 = vector.broadcast %152 : vector<1x32xf32> to vector<8x32xf32>
      %154 = arith.addf %151, %153 : vector<8x32xf32>
      %155 = arith.truncf %147 : vector<8x32xf32> to vector<8x32xbf16>
      %156 = vector.extract_strided_slice %155 {offsets = [0, 0], sizes = [8, 8], strides = [1, 1]} : vector<8x32xbf16> to vector<8x8xbf16>
      %157 = vector.shape_cast %156 : vector<8x8xbf16> to vector<1x8x8xbf16>
      %158 = vector.extract_strided_slice %155 {offsets = [0, 8], sizes = [8, 8], strides = [1, 1]} : vector<8x32xbf16> to vector<8x8xbf16>
      %159 = vector.shape_cast %158 : vector<8x8xbf16> to vector<1x8x8xbf16>
      %160 = vector.extract_strided_slice %155 {offsets = [0, 16], sizes = [8, 8], strides = [1, 1]} : vector<8x32xbf16> to vector<8x8xbf16>
      %161 = vector.shape_cast %160 : vector<8x8xbf16> to vector<1x8x8xbf16>
      %162 = vector.extract_strided_slice %155 {offsets = [0, 24], sizes = [8, 8], strides = [1, 1]} : vector<8x32xbf16> to vector<8x8xbf16>
      %163 = vector.shape_cast %162 : vector<8x8xbf16> to vector<1x8x8xbf16>
      %164 = tpu.concatenate %157, %159, %161, %163 in 0 : vector<1x8x8xbf16>, vector<1x8x8xbf16>, vector<1x8x8xbf16>, vector<1x8x8xbf16> -> vector<4x8x8xbf16>
      %c0_82 = arith.constant 0 : index
      %c0_83 = arith.constant 0 : index
      %c0_84 = arith.constant 0 : index
      %165 = vector.load %arg24[%c0_82, %c0_83, %c0_84] : memref<4x8x8xbf16, #tpu.memory_space<vmem>>, vector<4x8x8xbf16>
      tpu.vector_store %arg24[%c0_82, %c0_83, %c0_84], %164 {strides = array<i32>} : memref<4x8x8xbf16, #tpu.memory_space<vmem>>, vector<4x8x8xbf16>,
      %166 = arith.truncf %154 : vector<8x32xf32> to vector<8x32xbf16>
      %167 = vector.extract_strided_slice %166 {offsets = [0, 0], sizes = [8, 8], strides = [1, 1]} : vector<8x32xbf16> to vector<8x8xbf16>
      %168 = vector.shape_cast %167 : vector<8x8xbf16> to vector<1x8x8xbf16>
      %169 = vector.extract_strided_slice %166 {offsets = [0, 8], sizes = [8, 8], strides = [1, 1]} : vector<8x32xbf16> to vector<8x8xbf16>
      %170 = vector.shape_cast %169 : vector<8x8xbf16> to vector<1x8x8xbf16>
      %171 = vector.extract_strided_slice %166 {offsets = [0, 16], sizes = [8, 8], strides = [1, 1]} : vector<8x32xbf16> to vector<8x8xbf16>
      %172 = vector.shape_cast %171 : vector<8x8xbf16> to vector<1x8x8xbf16>
      %173 = vector.extract_strided_slice %166 {offsets = [0, 24], sizes = [8, 8], strides = [1, 1]} : vector<8x32xbf16> to vector<8x8xbf16>
      %174 = vector.shape_cast %173 : vector<8x8xbf16> to vector<1x8x8xbf16>
      %175 = tpu.concatenate %168, %170, %172, %174 in 0 : vector<1x8x8xbf16>, vector<1x8x8xbf16>, vector<1x8x8xbf16>, vector<1x8x8xbf16> -> vector<4x8x8xbf16>
      %c0_85 = arith.constant 0 : index
      %c0_86 = arith.constant 0 : index
      %c0_87 = arith.constant 0 : index
      %176 = vector.load %arg25[%c0_85, %c0_86, %c0_87] : memref<4x8x8xbf16, #tpu.memory_space<vmem>>, vector<4x8x8xbf16>
      tpu.vector_store %arg25[%c0_85, %c0_86, %c0_87], %175 {strides = array<i32>} : memref<4x8x8xbf16, #tpu.memory_space<vmem>>, vector<4x8x8xbf16>,
    } else {
    }
    %c0 = arith.constant 0 : index
    %c0_1 = arith.constant 0 : index
    %c0_2 = arith.constant 0 : index
    %3 = vector.load %arg3[%c0, %c0_1, %c0_2] : memref<1x8x32xf32, #tpu.memory_space<vmem>>, vector<1x8x32xf32>
    %4 = vector.shape_cast %3 : vector<1x8x32xf32> to vector<8x32xf32>
    %5 = arith.truncf %4 : vector<8x32xf32> to vector<8x32xbf16>
    %c0_3 = arith.constant 0 : index
    %c0_4 = arith.constant 0 : index
    %6 = vector.load %arg6[%c0_3, %c0_4] : memref<32x32xbf16, #tpu.memory_space<vmem>>, vector<32x32xbf16>
    %cst = arith.constant dense<0.000000e+00> : vector<8x32xf32>
    %7 = tpu.matmul %5, %6, %cst {dimension_numbers = #tpu.dot_dimension_numbers<[1], [0], [0], [1], [0, 0, 1, 1], [], []>} : vector<8x32xbf16>, vector<32x32xbf16>, vector<8x32xf32> -> vector<8x32xf32>
    %c0_5 = arith.constant 0 : index
    %c0_6 = arith.constant 0 : index
    %8 = vector.load %arg7[%c0_5, %c0_6] : memref<1x32xf32, #tpu.memory_space<vmem>>, vector<1x32xf32>
    %9 = vector.broadcast %8 : vector<1x32xf32> to vector<8x32xf32>
    %10 = arith.addf %7, %9 : vector<8x32xf32>
    %11 = arith.truncf %10 : vector<8x32xf32> to vector<8x32xbf16>
    %12 = vector.extract_strided_slice %11 {offsets = [0, 0], sizes = [8, 8], strides = [1, 1]} : vector<8x32xbf16> to vector<8x8xbf16>
    %13 = vector.shape_cast %12 : vector<8x8xbf16> to vector<1x8x8xbf16>
    %14 = vector.extract_strided_slice %11 {offsets = [0, 8], sizes = [8, 8], strides = [1, 1]} : vector<8x32xbf16> to vector<8x8xbf16>
    %15 = vector.shape_cast %14 : vector<8x8xbf16> to vector<1x8x8xbf16>
    %16 = vector.extract_strided_slice %11 {offsets = [0, 16], sizes = [8, 8], strides = [1, 1]} : vector<8x32xbf16> to vector<8x8xbf16>
    %17 = vector.shape_cast %16 : vector<8x8xbf16> to vector<1x8x8xbf16>
    %18 = vector.extract_strided_slice %11 {offsets = [0, 24], sizes = [8, 8], strides = [1, 1]} : vector<8x32xbf16> to vector<8x8xbf16>
    %19 = vector.shape_cast %18 : vector<8x8xbf16> to vector<1x8x8xbf16>
    %20 = tpu.concatenate %13, %15, %17, %19 in 0 : vector<1x8x8xbf16>, vector<1x8x8xbf16>, vector<1x8x8xbf16>, vector<1x8x8xbf16> -> vector<4x8x8xbf16>
    %c0_7 = arith.constant 0 : index
    %c0_8 = arith.constant 0 : index
    %c0_9 = arith.constant 0 : index
    %21 = vector.load %arg24[%c0_7, %c0_8, %c0_9] : memref<4x8x8xbf16, #tpu.memory_space<vmem>>, vector<4x8x8xbf16>
    %c0_10 = arith.constant 0 : index
    %c0_11 = arith.constant 0 : index
    %c0_12 = arith.constant 0 : index
    %22 = vector.load %arg25[%c0_10, %c0_11, %c0_12] : memref<4x8x8xbf16, #tpu.memory_space<vmem>>, vector<4x8x8xbf16>
    %cst_13 = arith.constant dense<0.000000e+00> : vector<4x8x8xf32>
    %23 = tpu.matmul %20, %21, %cst_13 {dimension_numbers = #tpu.dot_dimension_numbers<[2], [2], [1], [1], [0, 0, 0, 1, 1, 1], [0], [0]>} : vector<4x8x8xbf16>, vector<4x8x8xbf16>, vector<4x8x8xf32> -> vector<4x8x8xf32>
    %c8_i32 = arith.constant 8 : i32
    %24 = arith.muli %arg1, %c8_i32 : i32
    %25 = tpu.iota {dimensions = array<i32: 0>} : vector<8x8xi32>
    %26 = vector.broadcast %24 : i32 to vector<8x8xi32>
    %27 = arith.addi %26, %25 : vector<8x8xi32>
    %28 = tpu.iota {dimensions = array<i32: 1>} : vector<8x8xi32>
    %29 = arith.subi %27, %28 : vector<8x8xi32>
    %30 = arith.sitofp %29 : vector<8x8xi32> to vector<8x8xf32>
    %31 = math.absf %30 : vector<8x8xf32>
    %cst_14 = arith.constant 0.0476190485 : f32
    %32 = vector.broadcast %cst_14 : f32 to vector<8x8xf32>
    %33 = arith.mulf %31, %32 : vector<8x8xf32>
    %34 = vector.shape_cast %33 : vector<8x8xf32> to vector<1x8x8xf32>
    %c0_15 = arith.constant 0 : index
    %c0_16 = arith.constant 0 : index
    %35 = vector.load %arg2[%c0_15, %c0_16] : memref<4x1xf32, #tpu.memory_space<vmem>>, vector<4x1xf32>
    %36 = vector.shape_cast %35 : vector<4x1xf32> to vector<4x1x1xf32>
    %37 = vector.broadcast %34 : vector<1x8x8xf32> to vector<4x8x8xf32>
    %38 = vector.broadcast %36 : vector<4x1x1xf32> to vector<4x8x8xf32>
    %39 = arith.mulf %37, %38 : vector<4x8x8xf32>
    %40 = math.exp %39 : vector<4x8x8xf32>
    %cst_17 = arith.constant 9.99999974E-6 : f32
    %cst_18 = arith.constant 1.000000e+05 : f32
    %41 = vector.broadcast %cst_17 : f32 to vector<4x8x8xf32>
    %42 = arith.maximumf %41, %40 : vector<4x8x8xf32>
    %43 = vector.broadcast %cst_18 : f32 to vector<4x8x8xf32>
    %44 = arith.minimumf %43, %42 : vector<4x8x8xf32>
    %45 = arith.mulf %23, %44 : vector<4x8x8xf32>
    %46 = arith.cmpi sle, %28, %27 : vector<8x8xi32>
    %47 = vector.shape_cast %46 : vector<8x8xi1> to vector<1x8x8xi1>
    %cst_19 = arith.constant -1.000000e+32 : f32
    %48 = vector.shape_cast %47 : vector<1x8x8xi1> to vector<1x8x8xi1>
    %49 = vector.broadcast %48 : vector<1x8x8xi1> to vector<4x8x8xi1>
    %50 = vector.broadcast %cst_19 : f32 to vector<4x8x8xf32>
    %51 = arith.select %49, %45, %50 : vector<4x8x8xi1>, vector<4x8x8xf32>
    %cst_20 = arith.constant dense<0xFF800000> : vector<4x8xf32>
    %52 = vector.multi_reduction <maximumf>, %51, %cst_20 [2] : vector<4x8x8xf32> to vector<4x8xf32>
    %53 = vector.shape_cast %52 : vector<4x8xf32> to vector<4x8x1xf32>
    %54 = vector.broadcast %53 : vector<4x8x1xf32> to vector<4x8x8xf32>
    %55 = arith.subf %51, %54 : vector<4x8x8xf32>
    %56 = math.exp %55 : vector<4x8x8xf32>
    %cst_21 = arith.constant dense<0.000000e+00> : vector<4x8xf32>
    %57 = vector.multi_reduction <add>, %56, %cst_21 [2] : vector<4x8x8xf32> to vector<4x8xf32>
    %58 = vector.shape_cast %57 : vector<4x8xf32> to vector<4x8x1xf32>
    %59 = tpu.reciprocal %58 {approx = true} : vector<4x8x1xf32> -> vector<4x8x1xf32>
    %60 = vector.broadcast %59 : vector<4x8x1xf32> to vector<4x8x8xf32>
    %61 = arith.mulf %56, %60 : vector<4x8x8xf32>
    %62 = arith.truncf %61 : vector<4x8x8xf32> to vector<4x8x8xbf16>
    %c0_22 = arith.constant 0 : index
    %c0_23 = arith.constant 0 : index
    %c0_24 = arith.constant 0 : index
    %c0_25 = arith.constant 0 : index
    %63 = vector.load %arg23[%c0_22, %c0_23, %c0_24, %c0_25] : memref<1x4x8x8xbf16, #tpu.memory_space<vmem>>, vector<1x4x8x8xbf16>
    %64 = vector.shape_cast %63 : vector<1x4x8x8xbf16> to vector<4x8x8xbf16>
    %65 = vector.shape_cast %62 : vector<4x8x8xbf16> to vector<1x4x8x8xbf16>
    tpu.vector_store %arg23[%c0_22, %c0_23, %c0_24, %c0_25], %65 {strides = array<i32>} : memref<1x4x8x8xbf16, #tpu.memory_space<vmem>>, vector<1x4x8x8xbf16>,
    %cst_26 = arith.constant dense<0.000000e+00> : vector<4x8x8xf32>
    %66 = tpu.matmul %62, %22, %cst_26 {dimension_numbers = #tpu.dot_dimension_numbers<[2], [1], [1], [2], [0, 0, 0, 1, 1, 2], [0], [0]>} : vector<4x8x8xbf16>, vector<4x8x8xbf16>, vector<4x8x8xf32> -> vector<4x8x8xf32>
    %67 = arith.truncf %66 : vector<4x8x8xf32> to vector<4x8x8xbf16>
    %c0_27 = arith.constant 0 : index
    %c0_28 = arith.constant 0 : index
    %c0_29 = arith.constant 0 : index
    %68 = vector.load %arg12[%c0_27, %c0_28, %c0_29] : memref<4x8x32xbf16, #tpu.memory_space<vmem>>, vector<4x8x32xbf16>
    %cst_30 = arith.constant dense<0.000000e+00> : vector<4x8x32xf32>
    %69 = tpu.matmul %67, %68, %cst_30 {dimension_numbers = #tpu.dot_dimension_numbers<[2], [1], [1], [2], [0, 0, 0, 1, 1, 2], [0], [0]>} : vector<4x8x8xbf16>, vector<4x8x32xbf16>, vector<4x8x32xf32> -> vector<4x8x32xf32>
    %cst_31 = arith.constant dense<0.000000e+00> : vector<8x32xf32>
    %70 = vector.multi_reduction <add>, %69, %cst_31 [0] : vector<4x8x32xf32> to vector<8x32xf32>
    %c0_32 = arith.constant 0 : index
    %c0_33 = arith.constant 0 : index
    %71 = vector.load %arg13[%c0_32, %c0_33] : memref<1x32xf32, #tpu.memory_space<vmem>>, vector<1x32xf32>
    %72 = vector.broadcast %71 : vector<1x32xf32> to vector<8x32xf32>
    %73 = arith.addf %70, %72 : vector<8x32xf32>
    %74 = arith.addf %4, %73 : vector<8x32xf32>
    %cst_34 = arith.constant dense<0.000000e+00> : vector<8xf32>
    %75 = vector.multi_reduction <add>, %74, %cst_34 [1] : vector<8x32xf32> to vector<8xf32>
    %76 = vector.shape_cast %75 : vector<8xf32> to vector<8x1xf32>
    %cst_35 = arith.constant 3.200000e+01 : f32
    %77 = vector.broadcast %cst_35 : f32 to vector<8x1xf32>
    %78 = arith.divf %76, %77 : vector<8x1xf32>
    %79 = vector.broadcast %78 : vector<8x1xf32> to vector<8x32xf32>
    %80 = arith.subf %74, %79 : vector<8x32xf32>
    %81 = arith.mulf %80, %80 : vector<8x32xf32>
    %cst_36 = arith.constant dense<0.000000e+00> : vector<8xf32>
    %82 = vector.multi_reduction <add>, %81, %cst_36 [1] : vector<8x32xf32> to vector<8xf32>
    %83 = vector.shape_cast %82 : vector<8xf32> to vector<8x1xf32>
    %cst_37 = arith.constant 3.200000e+01 : f32
    %84 = vector.broadcast %cst_37 : f32 to vector<8x1xf32>
    %85 = arith.divf %83, %84 : vector<8x1xf32>
    %86 = vector.broadcast %78 : vector<8x1xf32> to vector<8x32xf32>
    %87 = arith.subf %74, %86 : vector<8x32xf32>
    %cst_38 = arith.constant 9.99999974E-6 : f32
    %88 = vector.broadcast %cst_38 : f32 to vector<8x1xf32>
    %89 = arith.addf %85, %88 : vector<8x1xf32>
    %90 = math.rsqrt %89 : vector<8x1xf32>
    %91 = vector.broadcast %90 : vector<8x1xf32> to vector<8x32xf32>
    %92 = arith.mulf %87, %91 : vector<8x32xf32>
    %c0_39 = arith.constant 0 : index
    %c0_40 = arith.constant 0 : index
    %93 = vector.load %arg14[%c0_39, %c0_40] : memref<1x32xf32, #tpu.memory_space<vmem>>, vector<1x32xf32>
    %94 = vector.broadcast %93 : vector<1x32xf32> to vector<8x32xf32>
    %95 = arith.mulf %92, %94 : vector<8x32xf32>
    %c0_41 = arith.constant 0 : index
    %c0_42 = arith.constant 0 : index
    %96 = vector.load %arg15[%c0_41, %c0_42] : memref<1x32xf32, #tpu.memory_space<vmem>>, vector<1x32xf32>
    %97 = vector.broadcast %96 : vector<1x32xf32> to vector<8x32xf32>
    %98 = arith.addf %95, %97 : vector<8x32xf32>
    %99 = arith.truncf %98 : vector<8x32xf32> to vector<8x32xbf16>
    %c0_43 = arith.constant 0 : index
    %c0_44 = arith.constant 0 : index
    %100 = vector.load %arg16[%c0_43, %c0_44] : memref<32x64xbf16, #tpu.memory_space<vmem>>, vector<32x64xbf16>
    %cst_45 = arith.constant dense<0.000000e+00> : vector<8x64xf32>
    %101 = tpu.matmul %99, %100, %cst_45 {dimension_numbers = #tpu.dot_dimension_numbers<[1], [0], [0], [1], [0, 0, 1, 1], [], []>} : vector<8x32xbf16>, vector<32x64xbf16>, vector<8x64xf32> -> vector<8x64xf32>
    %c0_46 = arith.constant 0 : index
    %c0_47 = arith.constant 0 : index
    %102 = vector.load %arg17[%c0_46, %c0_47] : memref<1x64xf32, #tpu.memory_space<vmem>>, vector<1x64xf32>
    %103 = vector.broadcast %102 : vector<1x64xf32> to vector<8x64xf32>
    %104 = arith.addf %101, %103 : vector<8x64xf32>
    %cst_48 = arith.constant 0.000000e+00 : f32
    %105 = vector.broadcast %cst_48 : f32 to vector<8x64xf32>
    %106 = arith.maximumf %104, %105 : vector<8x64xf32>
    %107 = arith.truncf %106 : vector<8x64xf32> to vector<8x64xbf16>
    %c0_49 = arith.constant 0 : index
    %c0_50 = arith.constant 0 : index
    %108 = vector.load %arg18[%c0_49, %c0_50] : memref<64x32xbf16, #tpu.memory_space<vmem>>, vector<64x32xbf16>
    %cst_51 = arith.constant dense<0.000000e+00> : vector<8x32xf32>
    %109 = tpu.matmul %107, %108, %cst_51 {dimension_numbers = #tpu.dot_dimension_numbers<[1], [0], [0], [1], [0, 0, 1, 1], [], []>} : vector<8x64xbf16>, vector<64x32xbf16>, vector<8x32xf32> -> vector<8x32xf32>
    %c0_52 = arith.constant 0 : index
    %c0_53 = arith.constant 0 : index
    %110 = vector.load %arg19[%c0_52, %c0_53] : memref<1x32xf32, #tpu.memory_space<vmem>>, vector<1x32xf32>
    %111 = vector.broadcast %110 : vector<1x32xf32> to vector<8x32xf32>
    %112 = arith.addf %109, %111 : vector<8x32xf32>
    %113 = arith.addf %98, %112 : vector<8x32xf32>
    %cst_54 = arith.constant dense<0.000000e+00> : vector<8xf32>
    %114 = vector.multi_reduction <add>, %113, %cst_54 [1] : vector<8x32xf32> to vector<8xf32>
    %115 = vector.shape_cast %114 : vector<8xf32> to vector<8x1xf32>
    %cst_55 = arith.constant 3.200000e+01 : f32
    %116 = vector.broadcast %cst_55 : f32 to vector<8x1xf32>
    %117 = arith.divf %115, %116 : vector<8x1xf32>
    %118 = vector.broadcast %117 : vector<8x1xf32> to vector<8x32xf32>
    %119 = arith.subf %113, %118 : vector<8x32xf32>
    %120 = arith.mulf %119, %119 : vector<8x32xf32>
    %cst_56 = arith.constant dense<0.000000e+00> : vector<8xf32>
    %121 = vector.multi_reduction <add>, %120, %cst_56 [1] : vector<8x32xf32> to vector<8xf32>
    %122 = vector.shape_cast %121 : vector<8xf32> to vector<8x1xf32>
    %cst_57 = arith.constant 3.200000e+01 : f32
    %123 = vector.broadcast %cst_57 : f32 to vector<8x1xf32>
    %124 = arith.divf %122, %123 : vector<8x1xf32>
    %125 = vector.broadcast %117 : vector<8x1xf32> to vector<8x32xf32>
    %126 = arith.subf %113, %125 : vector<8x32xf32>
    %cst_58 = arith.constant 9.99999974E-6 : f32
    %127 = vector.broadcast %cst_58 : f32 to vector<8x1xf32>
    %128 = arith.addf %124, %127 : vector<8x1xf32>
    %129 = math.rsqrt %128 : vector<8x1xf32>
    %130 = vector.broadcast %129 : vector<8x1xf32> to vector<8x32xf32>
    %131 = arith.mulf %126, %130 : vector<8x32xf32>
    %c0_59 = arith.constant 0 : index
    %c0_60 = arith.constant 0 : index
    %132 = vector.load %arg20[%c0_59, %c0_60] : memref<1x32xf32, #tpu.memory_space<vmem>>, vector<1x32xf32>
    %133 = vector.broadcast %132 : vector<1x32xf32> to vector<8x32xf32>
    %134 = arith.mulf %131, %133 : vector<8x32xf32>
    %c0_61 = arith.constant 0 : index
    %c0_62 = arith.constant 0 : index
    %135 = vector.load %arg21[%c0_61, %c0_62] : memref<1x32xf32, #tpu.memory_space<vmem>>, vector<1x32xf32>
    %136 = vector.broadcast %135 : vector<1x32xf32> to vector<8x32xf32>
    %137 = arith.addf %134, %136 : vector<8x32xf32>
    %c0_63 = arith.constant 0 : index
    %c0_64 = arith.constant 0 : index
    %c0_65 = arith.constant 0 : index
    %138 = vector.load %arg22[%c0_63, %c0_64, %c0_65] : memref<1x8x32xf32, #tpu.memory_space<vmem>>, vector<1x8x32xf32>
    %139 = vector.shape_cast %138 : vector<1x8x32xf32> to vector<8x32xf32>
    %140 = vector.shape_cast %137 : vector<8x32xf32> to vector<1x8x32xf32>
    tpu.vector_store %arg22[%c0_63, %c0_64, %c0_65], %140 {strides = array<i32>} : memref<1x8x32xf32, #tpu.memory_space<vmem>>, vector<1x8x32xf32>,
    return
  }
  func.func @transform_0(%arg0: i32, %arg1: i32) -> (i32, i32) {
    %c0_i32 = arith.constant 0 : i32
    %c0_i32_0 = arith.constant 0 : i32
    %c0_i32_1 = arith.constant 0 : i32
    return %c0_i32, %c0_i32_0 : i32, i32
  }
  func.func @transform_1(%arg0: i32, %arg1: i32) -> (i32, i32, i32) {
    %c0_i32 = arith.constant 0 : i32
    %c0_i32_0 = arith.constant 0 : i32
    return %arg0, %arg1, %c0_i32 : i32, i32, i32
  }
  func.func @transform_2(%arg0: i32, %arg1: i32) -> (i32, i32, i32) {
    %c0_i32 = arith.constant 0 : i32
    %c0_i32_0 = arith.constant 0 : i32
    %c0_i32_1 = arith.constant 0 : i32
    return %arg0, %c0_i32, %c0_i32_0 : i32, i32, i32
  }
  func.func @transform_3(%arg0: i32, %arg1: i32) -> (i32, i32, i32) {
    %c0_i32 = arith.constant 0 : i32
    %c0_i32_0 = arith.constant 0 : i32
    %c0_i32_1 = arith.constant 0 : i32
    return %arg0, %c0_i32, %c0_i32_0 : i32, i32, i32
  }
  func.func @transform_4(%arg0: i32, %arg1: i32) -> (i32, i32) {
    %c0_i32 = arith.constant 0 : i32
    %c0_i32_0 = arith.constant 0 : i32
    %c0_i32_1 = arith.constant 0 : i32
    return %c0_i32, %c0_i32_0 : i32, i32
  }
  func.func @transform_5(%arg0: i32, %arg1: i32) -> (i32, i32) {
    %c0_i32 = arith.constant 0 : i32
    %c0_i32_0 = arith.constant 0 : i32
    %c0_i32_1 = arith.constant 0 : i32
    return %c0_i32, %c0_i32_0 : i32, i32
  }
  func.func @transform_6(%arg0: i32, %arg1: i32) -> (i32, i32) {
    %c0_i32 = arith.constant 0 : i32
    %c0_i32_0 = arith.constant 0 : i32
    %c0_i32_1 = arith.constant 0 : i32
    return %c0_i32, %c0_i32_0 : i32, i32
  }
  func.func @transform_7(%arg0: i32, %arg1: i32) -> (i32, i32) {
    %c0_i32 = arith.constant 0 : i32
    %c0_i32_0 = arith.constant 0 : i32
    %c0_i32_1 = arith.constant 0 : i32
    return %c0_i32, %c0_i32_0 : i32, i32
  }
  func.func @transform_8(%arg0: i32, %arg1: i32) -> (i32, i32) {
    %c0_i32 = arith.constant 0 : i32
    %c0_i32_0 = arith.constant 0 : i32
    %c0_i32_1 = arith.constant 0 : i32
    return %c0_i32, %c0_i32_0 : i32, i32
  }
  func.func @transform_9(%arg0: i32, %arg1: i32) -> (i32, i32) {
    %c0_i32 = arith.constant 0 : i32
    %c0_i32_0 = arith.constant 0 : i32
    %c0_i32_1 = arith.constant 0 : i32
    return %c0_i32, %c0_i32_0 : i32, i32
  }
  func.func @transform_10(%arg0: i32, %arg1: i32) -> (i32, i32, i32) {
    %c0_i32 = arith.constant 0 : i32
    %c0_i32_0 = arith.constant 0 : i32
    %c0_i32_1 = arith.constant 0 : i32
    %c0_i32_2 = arith.constant 0 : i32
    return %c0_i32, %c0_i32_0, %c0_i32_1 : i32, i32, i32
  }
  func.func @transform_11(%arg0: i32, %arg1: i32) -> (i32, i32) {
    %c0_i32 = arith.constant 0 : i32
    %c0_i32_0 = arith.constant 0 : i32
    %c0_i32_1 = arith.constant 0 : i32
    return %c0_i32, %c0_i32_0 : i32, i32
  }
  func.func @transform_12(%arg0: i32, %arg1: i32) -> (i32, i32) {
    %c0_i32 = arith.constant 0 : i32
    %c0_i32_0 = arith.constant 0 : i32
    %c0_i32_1 = arith.constant 0 : i32
    return %c0_i32, %c0_i32_0 : i32, i32
  }
  func.func @transform_13(%arg0: i32, %arg1: i32) -> (i32, i32) {
    %c0_i32 = arith.constant 0 : i32
    %c0_i32_0 = arith.constant 0 : i32
    %c0_i32_1 = arith.constant 0 : i32
    return %c0_i32, %c0_i32_0 : i32, i32
  }
  func.func @transform_14(%arg0: i32, %arg1: i32) -> (i32, i32) {
    %c0_i32 = arith.constant 0 : i32
    %c0_i32_0 = arith.constant 0 : i32
    %c0_i32_1 = arith.constant 0 : i32
    return %c0_i32, %c0_i32_0 : i32, i32
  }
  func.func @transform_15(%arg0: i32, %arg1: i32) -> (i32, i32) {
    %c0_i32 = arith.constant 0 : i32
    %c0_i32_0 = arith.constant 0 : i32
    %c0_i32_1 = arith.constant 0 : i32
    return %c0_i32, %c0_i32_0 : i32, i32
  }
  func.func @transform_16(%arg0: i32, %arg1: i32) -> (i32, i32) {
    %c0_i32 = arith.constant 0 : i32
    %c0_i32_0 = arith.constant 0 : i32
    %c0_i32_1 = arith.constant 0 : i32
    return %c0_i32, %c0_i32_0 : i32, i32
  }
  func.func @transform_17(%arg0: i32, %arg1: i32) -> (i32, i32) {
    %c0_i32 = arith.constant 0 : i32
    %c0_i32_0 = arith.constant 0 : i32
    %c0_i32_1 = arith.constant 0 : i32
    return %c0_i32, %c0_i32_0 : i32, i32
  }
  func.func @transform_18(%arg0: i32, %arg1: i32) -> (i32, i32) {
    %c0_i32 = arith.constant 0 : i32
    %c0_i32_0 = arith.constant 0 : i32
    %c0_i32_1 = arith.constant 0 : i32
    return %c0_i32, %c0_i32_0 : i32, i32
  }
  func.func @transform_19(%arg0: i32, %arg1: i32) -> (i32, i32) {
    %c0_i32 = arith.constant 0 : i32
    %c0_i32_0 = arith.constant 0 : i32
    %c0_i32_1 = arith.constant 0 : i32
    return %c0_i32, %c0_i32_0 : i32, i32
  }
  func.func @transform_20(%arg0: i32, %arg1: i32) -> (i32, i32, i32) {
    %c0_i32 = arith.constant 0 : i32
    %c0_i32_0 = arith.constant 0 : i32
    return %arg0, %arg1, %c0_i32 : i32, i32, i32
  }
  func.func @transform_21(%arg0: i32, %arg1: i32) -> (i32, i32, i32, i32) {
    %c0_i32 = arith.constant 0 : i32
    %c0_i32_0 = arith.constant 0 : i32
    %c0_i32_1 = arith.constant 0 : i32
    return %arg0, %c0_i32, %arg1, %c0_i32_0 : i32, i32, i32, i32
  }
}

</mosaic_0001>

<llo_original>
// kernel: tpu_custom_call.1
$region0: #{tpu_custom_call.1}
  #allocation0 [shape = 'u32[]', space=smem, size = 0x4, offset = 0x4, fixed_abs, tag = 'smem constant byte address 0x4 - core index']
  #allocation1 [shape = 'u32[72,128]{1,0:T(1,128)}', space=vmem, size = 0x9000, scoped, tag = 'internal scratch']
  #allocation2 [shape = 'bf16[4,8,8]{2,1,0:T(8,128)(2,1)}', space=vmem, size = 0x2000, scoped, tag = 'scratch operand']
  #allocation3 [shape = 'bf16[4,8,8]{2,1,0:T(8,128)(2,1)}', space=vmem, size = 0x2000, scoped, tag = 'scratch operand']
  %s0 = inlined_call_operand.vmem [shape: f32[4,1], index: 0, kind: input, shape index: {}]
  %s1 = inlined_call_operand.vmem [shape: f32[2,8,32], index: 1, kind: input, shape index: {}]
  %s2 = inlined_call_operand.hbm [shape: bf16[2,8,32], index: 2, kind: input, shape index: {}]
  %s3 = inlined_call_operand.hbm [shape: bf16[2,8,32], index: 3, kind: input, shape index: {}]
  %s4 = inlined_call_operand.vmem [shape: bf16[32,32], index: 4, kind: input, shape index: {}]
  %s5 = inlined_call_operand.vmem [shape: f32[1,32], index: 5, kind: input, shape index: {}]
  %s6 = inlined_call_operand.vmem [shape: bf16[32,32], index: 6, kind: input, shape index: {}]
  %s7 = inlined_call_operand.vmem [shape: f32[1,32], index: 7, kind: input, shape index: {}]
  %s8 = inlined_call_operand.hbm [shape: bf16[32,32], index: 8, kind: input, shape index: {}]
  %s9 = inlined_call_operand.vmem [shape: f32[1,32], index: 9, kind: input, shape index: {}]
  %s10 = inlined_call_operand.hbm [shape: bf16[4,8,32], index: 10, kind: input, shape index: {}]
  %s11 = inlined_call_operand.vmem [shape: f32[1,32], index: 11, kind: input, shape index: {}]
  %s12 = inlined_call_operand.hbm [shape: f32[1,32], index: 12, kind: input, shape index: {}]
  %s13 = inlined_call_operand.hbm [shape: f32[1,32], index: 13, kind: input, shape index: {}]
  %s14 = inlined_call_operand.hbm [shape: bf16[32,64], index: 14, kind: input, shape index: {}]
  %s15 = inlined_call_operand.hbm [shape: f32[1,64], index: 15, kind: input, shape index: {}]
  %s16 = inlined_call_operand.vmem [shape: bf16[64,32], index: 16, kind: input, shape index: {}]
  %s17 = inlined_call_operand.vmem [shape: f32[1,32], index: 17, kind: input, shape index: {}]
  %s18 = inlined_call_operand.vmem [shape: f32[1,32], index: 18, kind: input, shape index: {}]
  %s19 = inlined_call_operand.vmem [shape: f32[1,32], index: 19, kind: input, shape index: {}]
  %s20 = inlined_call_operand.hbm [shape: f32[2,8,32], index: 20, kind: output, shape index: {0}]
  %s21 = inlined_call_operand.hbm [shape: bf16[2,4,8,8], index: 21, kind: output, shape index: {1}]
  %22 = xla_tuple %s20, %s21
  %s23 = sld [smem:[#allocation0]]
  $region157: #{tpu_custom_call.1} parent=0
    _
  %s25 = ssub.s32 1, %s23
  %s26 = scalar_select 0, %s25, %s23
  $region1: #{tpu_custom_call.1} parent=0
    #allocation4 [shape = 'u8[4096]{0}', space=vmem, size = 0x1000, scoped, tag = 'input window, operand 2']
    #allocation5 [shape = 's32[2]{0}', space=sflag, size = 0x8, scoped, tag = 'scoped memory for tpu_custom_call.1']
    #allocation6 [shape = 's32[2]{0}', space=sflag, size = 0x8, scoped, tag = 'scoped memory for tpu_custom_call.1']
    #allocation7 [shape = 'u8[4096]{0}', space=vmem, size = 0x1000, scoped, tag = 'input window, operand 3']
    #allocation8 [shape = 's32[2]{0}', space=sflag, size = 0x8, scoped, tag = 'scoped memory for tpu_custom_call.1']
    #allocation9 [shape = 'u8[8192]{0}', space=vmem, size = 0x2000, scoped, tag = 'input window, operand 8, single buffered']
    #allocation10 [shape = 'u8[8192]{0}', space=vmem, size = 0x2000, scoped, tag = 'input window, operand 10, single buffered']
    #allocation11 [shape = 's32[1]{0}', space=sflag, size = 0x4, scoped, tag = 'scoped memory for tpu_custom_call.1']
    #allocation12 [shape = 'u8[512]{0}', space=vmem, size = 0x400, scoped, tag = 'input window, operand 12, single buffered']
    #allocation13 [shape = 'u8[512]{0}', space=vmem, size = 0x400, scoped, tag = 'input window, operand 13, single buffered']
    #allocation14 [shape = 's32[1]{0}', space=sflag, size = 0x4, scoped, tag = 'scoped memory for tpu_custom_call.1']
    #allocation15 [shape = 'u8[8192]{0}', space=vmem, size = 0x2000, scoped, tag = 'input window, operand 14, single buffered']
    #allocation16 [shape = 'u8[512]{0}', space=vmem, size = 0x400, scoped, tag = 'input window, operand 15, single buffered']
    #allocation17 [shape = 's32[1]{0}', space=sflag, size = 0x4, scoped, tag = 'scoped memory for tpu_custom_call.1']
    #allocation18 [shape = 'u8[8192]{0}', space=vmem, size = 0x2000, scoped, tag = 'output window, operand 0']
    #allocation19 [shape = 'u8[16384]{0}', space=vmem, size = 0x4000, scoped, tag = 'output window, operand 1']
    #allocation20 [shape = 's32[2]{0}', space=sflag, size = 0x8, scoped, tag = 'scoped memory for tpu_custom_call.1']
    %27 = vsyncpa [#allocation5], 0
    %s28 = scalar_lea.sflag [#allocation5], 1
    %29 = vsyncpa %s28, 0
    %30 = vsyncpa [#allocation8], 0
    %s31 = scalar_lea.sflag [#allocation8], 1
    %32 = vsyncpa %s31, 0
    %33 = vsyncpa [#allocation11], 0
    %34 = vsyncpa [#allocation14], 0
    %35 = vsyncpa [#allocation17], 0
    %36 = vsyncpa [#allocation6], 0
    %s37 = scalar_lea.sflag [#allocation6], 1
    %38 = vsyncpa %s37, 0
    %39 = vsyncpa [#allocation20], 0
    %s40 = scalar_lea.sflag [#allocation20], 1
    %41 = vsyncpa %s40, 0
    loop: start=0, step=1, limit=4
    $region2: #{tpu_custom_call.1} parent=1 // loop_pre_header
      _
    $region3: #{tpu_custom_call.1} parent=1 // loop_header
      %s43 = sphi 0, %s47
      %p44 = scmp.ge.s32.totalorder %s43, 4
      %s50 = sphi 0, %s62
      %s51 = sphi 0, %s58
      %s52 = sphi 0, %s50
      %s53 = sphi 0, %s51
      %s54 = sphi 0, %s52
      %s55 = sphi 0, %s53
      %s63 = sphi 0, %s63
      %s65 = sphi 0, %s63
      %s66 = sphi 0, %s65
      %s80 = sphi 0, %s66
      %s88 = sphi 0, %s90
      %s91 = sphi 0, %s88
      %s92 = sphi 0, %s91
      %s108 = sphi 0, %s92
      %s114 = sphi 0, %s116
      %s117 = sphi 0, %s114
      %s118 = sphi 0, %s117
      %s134 = sphi 0, %s118
      %s140 = sphi 0, %s142
      %s143 = sphi 0, %s140
      %s144 = sphi 0, %s143
      %s160 = sphi 0, %s144
      %s164 = sphi 0, %s164
      %s166 = sphi 0, %s164
      %s167 = sphi 0, %s166
      %s181 = sphi 0, %s167
      %s185 = sphi 0, %s185
      %s187 = sphi 0, %s185
      %s188 = sphi 0, %s187
      %s202 = sphi 0, %s188
      %s206 = sphi 0, %s206
      %s208 = sphi 0, %s206
      %s209 = sphi 0, %s208
      %s223 = sphi 0, %s209
      %s227 = sphi 0, %s227
      %s229 = sphi 0, %s227
      %s230 = sphi 0, %s229
      %s244 = sphi 0, %s230
      %s248 = sphi 0, %s248
      %s250 = sphi 0, %s248
      %s251 = sphi 0, %s250
      %s265 = sphi 0, %s251
      %s269 = sphi 0, %s269
      %s271 = sphi 0, %s269
      %s272 = sphi 0, %s271
      %s286 = sphi 0, %s272
      %s290 = sphi 0, %s290
      %s292 = sphi 0, %s290
      %s293 = sphi 0, %s292
      %s307 = sphi 0, %s293
      %s311 = sphi 0, %s311
      %s313 = sphi 0, %s311
      %s314 = sphi 0, %s313
      %s328 = sphi 0, %s314
      %s332 = sphi 0, %s332
      %s334 = sphi 0, %s332
      %s335 = sphi 0, %s334
      %s349 = sphi 0, %s335
      %s353 = sphi 0, %s353
      %s355 = sphi 0, %s353
      %s356 = sphi 0, %s355
      %s370 = sphi 0, %s356
      %s374 = sphi 0, %s374
      %s376 = sphi 0, %s374
      %s377 = sphi 0, %s376
      %s391 = sphi 0, %s377
      %s395 = sphi 0, %s395
      %s397 = sphi 0, %s395
      %s398 = sphi 0, %s397
      %s412 = sphi 0, %s398
      %s416 = sphi 0, %s416
      %s418 = sphi 0, %s416
      %s419 = sphi 0, %s418
      %s433 = sphi 0, %s419
      %s437 = sphi 0, %s437
      %s439 = sphi 0, %s437
      %s440 = sphi 0, %s439
      %s454 = sphi 0, %s440
      %s458 = sphi 0, %s458
      %s460 = sphi 0, %s458
      %s461 = sphi 0, %s460
      %s475 = sphi 0, %s461
      %s479 = sphi 0, %s479
      %s481 = sphi 0, %s479
      %s482 = sphi 0, %s481
      %s496 = sphi 0, %s482
      %s504 = sphi 0, %s506
      %s507 = sphi 0, %s504
      %s508 = sphi 0, %s507
      %s524 = sphi 0, %s508
      %s532 = sphi 0, %s534
      %s535 = sphi 0, %s532
      %s536 = sphi 0, %s535
      %s552 = sphi 0, %s536
    $region4: #{tpu_custom_call.1} parent=1 // loop_header_branch
      %46 = sbr.rel (%p44) target = $region8
    $region5: #{tpu_custom_call.1} parent=1 // loop_body
      %s48 = ssub.s32 %s43, 1
      %s49 = ssub.s32 %s43, 2
      %s56 = sadd.s32 1, %s51
      %p57 = scmp.ge.s32.totalorder %s56, 1
      %s58 = scalar_select %p57, 0, %s56
      %s59 = sadd.s32 1, %s50
      %s60 = scalar_select %p57, %s59, %s50
      %p61 = scmp.ge.s32.totalorder %s60, 2
      %s62 = scalar_select %p61, 0, %s60
      %s64 = sadd.s32 %s63, 1
      %p67 = scmp.eq.s32.totalorder %s43, 1
      %p68 = scmp.ne.s32.totalorder %s63, %s65
      %p69 = scmp.eq.s32.totalorder %s43, 0
      %p70 = por %p68, %p69
      %p71 = scmp.ne.s32.totalorder %s63, %s65
      %p72 = scmp.eq.s32.totalorder %s48, 1
      %p73 = por %p71, %p72
      %p74 = scmp.ne.s32.totalorder %s65, %s66
      %p75 = scmp.eq.s32.totalorder %s48, 0
      %p76 = por %p74, %p75
      %p77 = scmp.ne.s32.totalorder %s65, %s66
      %p78 = scmp.eq.s32.totalorder %s49, 1
      %p79 = por %p77, %p78
      %p81 = scmp.ne.s32.totalorder %s66, %s80
      %p82 = scmp.eq.s32.totalorder %s49, 0
      %p83 = por %p81, %p82
      %s84 = ssub.s32 %s50, %s62
      %s85 = ssub.s32 %s51, %s58
      %s86 = sor.u32 %s84, %s85
      %p87 = scmp.eq.s32.totalorder %s86, 0
      %s89 = sadd.s32 %s88, 1
      %s90 = scalar_select %p87, %s88, %s89
      %p93 = pneg %p87
      %p94 = scmp.eq.s32.totalorder %s43, 1
      %p95 = por %p93, %p94
      %p96 = scmp.ne.s32.totalorder %s88, %s91
      %p97 = scmp.eq.s32.totalorder %s43, 0
      %p98 = por %p96, %p97
      %p99 = scmp.ne.s32.totalorder %s88, %s91
      %p100 = scmp.eq.s32.totalorder %s48, 1
      %p101 = por %p99, %p100
      %p102 = scmp.ne.s32.totalorder %s91, %s92
      %p103 = scmp.eq.s32.totalorder %s48, 0
      %p104 = por %p102, %p103
      %p105 = scmp.ne.s32.totalorder %s91, %s92
      %p106 = scmp.eq.s32.totalorder %s49, 1
      %p107 = por %p105, %p106
      %p109 = scmp.ne.s32.totalorder %s92, %s108
      %p110 = scmp.eq.s32.totalorder %s49, 0
      %p111 = por %p109, %p110
      %s112 = ssub.s32 %s50, %s62
      %p113 = scmp.eq.s32.totalorder %s112, 0
      %s115 = sadd.s32 %s114, 1
      %s116 = scalar_select %p113, %s114, %s115
      %p119 = pneg %p113
      %p120 = scmp.eq.s32.totalorder %s43, 1
      %p121 = por %p119, %p120
      %p122 = scmp.ne.s32.totalorder %s114, %s117
      %p123 = scmp.eq.s32.totalorder %s43, 0
      %p124 = por %p122, %p123
      %p125 = scmp.ne.s32.totalorder %s114, %s117
      %p126 = scmp.eq.s32.totalorder %s48, 1
      %p127 = por %p125, %p126
      %p128 = scmp.ne.s32.totalorder %s117, %s118
      %p129 = scmp.eq.s32.totalorder %s48, 0
      %p130 = por %p128, %p129
      %p131 = scmp.ne.s32.totalorder %s117, %s118
      %p132 = scmp.eq.s32.totalorder %s49, 1
      %p133 = por %p131, %p132
      %p135 = scmp.ne.s32.totalorder %s118, %s134
      %p136 = scmp.eq.s32.totalorder %s49, 0
      %p137 = por %p135, %p136
      %s138 = ssub.s32 %s50, %s62
      %p139 = scmp.eq.s32.totalorder %s138, 0
      %s141 = sadd.s32 %s140, 1
      %s142 = scalar_select %p139, %s140, %s141
      %p145 = pneg %p139
      %p146 = scmp.eq.s32.totalorder %s43, 1
      %p147 = por %p145, %p146
      %p148 = scmp.ne.s32.totalorder %s140, %s143
      %p149 = scmp.eq.s32.totalorder %s43, 0
      %p150 = por %p148, %p149
      %p151 = scmp.ne.s32.totalorder %s140, %s143
      %p152 = scmp.eq.s32.totalorder %s48, 1
      %p153 = por %p151, %p152
      %p154 = scmp.ne.s32.totalorder %s143, %s144
      %p155 = scmp.eq.s32.totalorder %s48, 0
      %p156 = por %p154, %p155
      %p157 = scmp.ne.s32.totalorder %s143, %s144
      %p158 = scmp.eq.s32.totalorder %s49, 1
      %p159 = por %p157, %p158
      %p161 = scmp.ne.s32.totalorder %s144, %s160
      %p162 = scmp.eq.s32.totalorder %s49, 0
      %p163 = por %p161, %p162
      %s165 = sadd.s32 %s164, 1
      %p168 = scmp.eq.s32.totalorder %s43, 1
      %p169 = scmp.ne.s32.totalorder %s164, %s166
      %p170 = scmp.eq.s32.totalorder %s43, 0
      %p171 = por %p169, %p170
      %p172 = scmp.ne.s32.totalorder %s164, %s166
      %p173 = scmp.eq.s32.totalorder %s48, 1
      %p174 = por %p172, %p173
      %p175 = scmp.ne.s32.totalorder %s166, %s167
      %p176 = scmp.eq.s32.totalorder %s48, 0
      %p177 = por %p175, %p176
      %p178 = scmp.ne.s32.totalorder %s166, %s167
      %p179 = scmp.eq.s32.totalorder %s49, 1
      %p180 = por %p178, %p179
      %p182 = scmp.ne.s32.totalorder %s167, %s181
      %p183 = scmp.eq.s32.totalorder %s49, 0
      %p184 = por %p182, %p183
      %s186 = sadd.s32 %s185, 1
      %p189 = scmp.eq.s32.totalorder %s43, 1
      %p190 = scmp.ne.s32.totalorder %s185, %s187
      %p191 = scmp.eq.s32.totalorder %s43, 0
      %p192 = por %p190, %p191
      %p193 = scmp.ne.s32.totalorder %s185, %s187
      %p194 = scmp.eq.s32.totalorder %s48, 1
      %p195 = por %p193, %p194
      %p196 = scmp.ne.s32.totalorder %s187, %s188
      %p197 = scmp.eq.s32.totalorder %s48, 0
      %p198 = por %p196, %p197
      %p199 = scmp.ne.s32.totalorder %s187, %s188
      %p200 = scmp.eq.s32.totalorder %s49, 1
      %p201 = por %p199, %p200
      %p203 = scmp.ne.s32.totalorder %s188, %s202
      %p204 = scmp.eq.s32.totalorder %s49, 0
      %p205 = por %p203, %p204
      %s207 = sadd.s32 %s206, 1
      %p210 = scmp.eq.s32.totalorder %s43, 1
      %p211 = scmp.ne.s32.totalorder %s206, %s208
      %p212 = scmp.eq.s32.totalorder %s43, 0
      %p213 = por %p211, %p212
      %p214 = scmp.ne.s32.totalorder %s206, %s208
      %p215 = scmp.eq.s32.totalorder %s48, 1
      %p216 = por %p214, %p215
      %p217 = scmp.ne.s32.totalorder %s208, %s209
      %p218 = scmp.eq.s32.totalorder %s48, 0
      %p219 = por %p217, %p218
      %p220 = scmp.ne.s32.totalorder %s208, %s209
      %p221 = scmp.eq.s32.totalorder %s49, 1
      %p222 = por %p220, %p221
      %p224 = scmp.ne.s32.totalorder %s209, %s223
      %p225 = scmp.eq.s32.totalorder %s49, 0
      %p226 = por %p224, %p225
      %s228 = sadd.s32 %s227, 1
      %p231 = scmp.eq.s32.totalorder %s43, 1
      %p232 = scmp.ne.s32.totalorder %s227, %s229
      %p233 = scmp.eq.s32.totalorder %s43, 0
      %p234 = por %p232, %p233
      %p235 = scmp.ne.s32.totalorder %s227, %s229
      %p236 = scmp.eq.s32.totalorder %s48, 1
      %p237 = por %p235, %p236
      %p238 = scmp.ne.s32.totalorder %s229, %s230
      %p239 = scmp.eq.s32.totalorder %s48, 0
      %p240 = por %p238, %p239
      %p241 = scmp.ne.s32.totalorder %s229, %s230
      %p242 = scmp.eq.s32.totalorder %s49, 1
      %p243 = por %p241, %p242
      %p245 = scmp.ne.s32.totalorder %s230, %s244
      %p246 = scmp.eq.s32.totalorder %s49, 0
      %p247 = por %p245, %p246
      %s249 = sadd.s32 %s248, 1
      %p252 = scmp.eq.s32.totalorder %s43, 1
      %p253 = scmp.ne.s32.totalorder %s248, %s250
      %p254 = scmp.eq.s32.totalorder %s43, 0
      %p255 = por %p253, %p254
      %p256 = scmp.ne.s32.totalorder %s248, %s250
      %p257 = scmp.eq.s32.totalorder %s48, 1
      %p258 = por %p256, %p257
      %p259 = scmp.ne.s32.totalorder %s250, %s251
      %p260 = scmp.eq.s32.totalorder %s48, 0
      %p261 = por %p259, %p260
      %p262 = scmp.ne.s32.totalorder %s250, %s251
      %p263 = scmp.eq.s32.totalorder %s49, 1
      %p264 = por %p262, %p263
      %p266 = scmp.ne.s32.totalorder %s251, %s265
      %p267 = scmp.eq.s32.totalorder %s49, 0
      %p268 = por %p266, %p267
      %s270 = sadd.s32 %s269, 1
      %p273 = scmp.eq.s32.totalorder %s43, 1
      %p274 = scmp.ne.s32.totalorder %s269, %s271
      %p275 = scmp.eq.s32.totalorder %s43, 0
      %p276 = por %p274, %p275
      %p277 = scmp.ne.s32.totalorder %s269, %s271
      %p278 = scmp.eq.s32.totalorder %s48, 1
      %p279 = por %p277, %p278
      %p280 = scmp.ne.s32.totalorder %s271, %s272
      %p281 = scmp.eq.s32.totalorder %s48, 0
      %p282 = por %p280, %p281
      %p283 = scmp.ne.s32.totalorder %s271, %s272
      %p284 = scmp.eq.s32.totalorder %s49, 1
      %p285 = por %p283, %p284
      %p287 = scmp.ne.s32.totalorder %s272, %s286
      %p288 = scmp.eq.s32.totalorder %s49, 0
      %p289 = por %p287, %p288
      %s291 = sadd.s32 %s290, 1
      %p294 = scmp.eq.s32.totalorder %s43, 1
      %p295 = scmp.ne.s32.totalorder %s290, %s292
      %p296 = scmp.eq.s32.totalorder %s43, 0
      %p297 = por %p295, %p296
      %p298 = scmp.ne.s32.totalorder %s290, %s292
      %p299 = scmp.eq.s32.totalorder %s48, 1
      %p300 = por %p298, %p299
      %p301 = scmp.ne.s32.totalorder %s292, %s293
      %p302 = scmp.eq.s32.totalorder %s48, 0
      %p303 = por %p301, %p302
      %p304 = scmp.ne.s32.totalorder %s292, %s293
      %p305 = scmp.eq.s32.totalorder %s49, 1
      %p306 = por %p304, %p305
      %p308 = scmp.ne.s32.totalorder %s293, %s307
      %p309 = scmp.eq.s32.totalorder %s49, 0
      %p310 = por %p308, %p309
      %s312 = sadd.s32 %s311, 1
      %p315 = scmp.eq.s32.totalorder %s43, 1
      %p316 = scmp.ne.s32.totalorder %s311, %s313
      %p317 = scmp.eq.s32.totalorder %s43, 0
      %p318 = por %p316, %p317
      %p319 = scmp.ne.s32.totalorder %s311, %s313
      %p320 = scmp.eq.s32.totalorder %s48, 1
      %p321 = por %p319, %p320
      %p322 = scmp.ne.s32.totalorder %s313, %s314
      %p323 = scmp.eq.s32.totalorder %s48, 0
      %p324 = por %p322, %p323
      %p325 = scmp.ne.s32.totalorder %s313, %s314
      %p326 = scmp.eq.s32.totalorder %s49, 1
      %p327 = por %p325, %p326
      %p329 = scmp.ne.s32.totalorder %s314, %s328
      %p330 = scmp.eq.s32.totalorder %s49, 0
      %p331 = por %p329, %p330
      %s333 = sadd.s32 %s332, 1
      %p336 = scmp.eq.s32.totalorder %s43, 1
      %p337 = scmp.ne.s32.totalorder %s332, %s334
      %p338 = scmp.eq.s32.totalorder %s43, 0
      %p339 = por %p337, %p338
      %p340 = scmp.ne.s32.totalorder %s332, %s334
      %p341 = scmp.eq.s32.totalorder %s48, 1
      %p342 = por %p340, %p341
      %p343 = scmp.ne.s32.totalorder %s334, %s335
      %p344 = scmp.eq.s32.totalorder %s48, 0
      %p345 = por %p343, %p344
      %p346 = scmp.ne.s32.totalorder %s334, %s335
      %p347 = scmp.eq.s32.totalorder %s49, 1
      %p348 = por %p346, %p347
      %p350 = scmp.ne.s32.totalorder %s335, %s349
      %p351 = scmp.eq.s32.totalorder %s49, 0
      %p352 = por %p350, %p351
      %s354 = sadd.s32 %s353, 1
      %p357 = scmp.eq.s32.totalorder %s43, 1
      %p358 = scmp.ne.s32.totalorder %s353, %s355
      %p359 = scmp.eq.s32.totalorder %s43, 0
      %p360 = por %p358, %p359
      %p361 = scmp.ne.s32.totalorder %s353, %s355
      %p362 = scmp.eq.s32.totalorder %s48, 1
      %p363 = por %p361, %p362
      %p364 = scmp.ne.s32.totalorder %s355, %s356
      %p365 = scmp.eq.s32.totalorder %s48, 0
      %p366 = por %p364, %p365
      %p367 = scmp.ne.s32.totalorder %s355, %s356
      %p368 = scmp.eq.s32.totalorder %s49, 1
      %p369 = por %p367, %p368
      %p371 = scmp.ne.s32.totalorder %s356, %s370
      %p372 = scmp.eq.s32.totalorder %s49, 0
      %p373 = por %p371, %p372
      %s375 = sadd.s32 %s374, 1
      %p378 = scmp.eq.s32.totalorder %s43, 1
      %p379 = scmp.ne.s32.totalorder %s374, %s376
      %p380 = scmp.eq.s32.totalorder %s43, 0
      %p381 = por %p379, %p380
      %p382 = scmp.ne.s32.totalorder %s374, %s376
      %p383 = scmp.eq.s32.totalorder %s48, 1
      %p384 = por %p382, %p383
      %p385 = scmp.ne.s32.totalorder %s376, %s377
      %p386 = scmp.eq.s32.totalorder %s48, 0
      %p387 = por %p385, %p386
      %p388 = scmp.ne.s32.totalorder %s376, %s377
      %p389 = scmp.eq.s32.totalorder %s49, 1
      %p390 = por %p388, %p389
      %p392 = scmp.ne.s32.totalorder %s377, %s391
      %p393 = scmp.eq.s32.totalorder %s49, 0
      %p394 = por %p392, %p393
      %s396 = sadd.s32 %s395, 1
      %p399 = scmp.eq.s32.totalorder %s43, 1
      %p400 = scmp.ne.s32.totalorder %s395, %s397
      %p401 = scmp.eq.s32.totalorder %s43, 0
      %p402 = por %p400, %p401
      %p403 = scmp.ne.s32.totalorder %s395, %s397
      %p404 = scmp.eq.s32.totalorder %s48, 1
      %p405 = por %p403, %p404
      %p406 = scmp.ne.s32.totalorder %s397, %s398
      %p407 = scmp.eq.s32.totalorder %s48, 0
      %p408 = por %p406, %p407
      %p409 = scmp.ne.s32.totalorder %s397, %s398
      %p410 = scmp.eq.s32.totalorder %s49, 1
      %p411 = por %p409, %p410
      %p413 = scmp.ne.s32.totalorder %s398, %s412
      %p414 = scmp.eq.s32.totalorder %s49, 0
      %p415 = por %p413, %p414
      %s417 = sadd.s32 %s416, 1
      %p420 = scmp.eq.s32.totalorder %s43, 1
      %p421 = scmp.ne.s32.totalorder %s416, %s418
      %p422 = scmp.eq.s32.totalorder %s43, 0
      %p423 = por %p421, %p422
      %p424 = scmp.ne.s32.totalorder %s416, %s418
      %p425 = scmp.eq.s32.totalorder %s48, 1
      %p426 = por %p424, %p425
      %p427 = scmp.ne.s32.totalorder %s418, %s419
      %p428 = scmp.eq.s32.totalorder %s48, 0
      %p429 = por %p427, %p428
      %p430 = scmp.ne.s32.totalorder %s418, %s419
      %p431 = scmp.eq.s32.totalorder %s49, 1
      %p432 = por %p430, %p431
      %p434 = scmp.ne.s32.totalorder %s419, %s433
      %p435 = scmp.eq.s32.totalorder %s49, 0
      %p436 = por %p434, %p435
      %s438 = sadd.s32 %s437, 1
      %p441 = scmp.eq.s32.totalorder %s43, 1
      %p442 = scmp.ne.s32.totalorder %s437, %s439
      %p443 = scmp.eq.s32.totalorder %s43, 0
      %p444 = por %p442, %p443
      %p445 = scmp.ne.s32.totalorder %s437, %s439
      %p446 = scmp.eq.s32.totalorder %s48, 1
      %p447 = por %p445, %p446
      %p448 = scmp.ne.s32.totalorder %s439, %s440
      %p449 = scmp.eq.s32.totalorder %s48, 0
      %p450 = por %p448, %p449
      %p451 = scmp.ne.s32.totalorder %s439, %s440
      %p452 = scmp.eq.s32.totalorder %s49, 1
      %p453 = por %p451, %p452
      %p455 = scmp.ne.s32.totalorder %s440, %s454
      %p456 = scmp.eq.s32.totalorder %s49, 0
      %p457 = por %p455, %p456
      %s459 = sadd.s32 %s458, 1
      %p462 = scmp.eq.s32.totalorder %s43, 1
      %p463 = scmp.ne.s32.totalorder %s458, %s460
      %p464 = scmp.eq.s32.totalorder %s43, 0
      %p465 = por %p463, %p464
      %p466 = scmp.ne.s32.totalorder %s458, %s460
      %p467 = scmp.eq.s32.totalorder %s48, 1
      %p468 = por %p466, %p467
      %p469 = scmp.ne.s32.totalorder %s460, %s461
      %p470 = scmp.eq.s32.totalorder %s48, 0
      %p471 = por %p469, %p470
      %p472 = scmp.ne.s32.totalorder %s460, %s461
      %p473 = scmp.eq.s32.totalorder %s49, 1
      %p474 = por %p472, %p473
      %p476 = scmp.ne.s32.totalorder %s461, %s475
      %p477 = scmp.eq.s32.totalorder %s49, 0
      %p478 = por %p476, %p477
      %s480 = sadd.s32 %s479, 1
      %p483 = scmp.eq.s32.totalorder %s43, 1
      %p484 = scmp.ne.s32.totalorder %s479, %s481
      %p485 = scmp.eq.s32.totalorder %s43, 0
      %p486 = por %p484, %p485
      %p487 = scmp.ne.s32.totalorder %s479, %s481
      %p488 = scmp.eq.s32.totalorder %s48, 1
      %p489 = por %p487, %p488
      %p490 = scmp.ne.s32.totalorder %s481, %s482
      %p491 = scmp.eq.s32.totalorder %s48, 0
      %p492 = por %p490, %p491
      %p493 = scmp.ne.s32.totalorder %s481, %s482
      %p494 = scmp.eq.s32.totalorder %s49, 1
      %p495 = por %p493, %p494
      %p497 = scmp.ne.s32.totalorder %s482, %s496
      %p498 = scmp.eq.s32.totalorder %s49, 0
      %p499 = por %p497, %p498
      %s500 = ssub.s32 %s50, %s62
      %s501 = ssub.s32 %s51, %s58
      %s502 = sor.u32 %s500, %s501
      %p503 = scmp.eq.s32.totalorder %s502, 0
      %s505 = sadd.s32 %s504, 1
      %s506 = scalar_select %p503, %s504, %s505
      %p509 = pneg %p503
      %p510 = scmp.eq.s32.totalorder %s43, 1
      %p511 = por %p509, %p510
      %p512 = scmp.ne.s32.totalorder %s504, %s507
      %p513 = scmp.eq.s32.totalorder %s43, 0
      %p514 = por %p512, %p513
      %p515 = scmp.ne.s32.totalorder %s504, %s507
      %p516 = scmp.eq.s32.totalorder %s48, 1
      %p517 = por %p515, %p516
      %p518 = scmp.ne.s32.totalorder %s507, %s508
      %p519 = scmp.eq.s32.totalorder %s48, 0
      %p520 = por %p518, %p519
      %p521 = scmp.ne.s32.totalorder %s507, %s508
      %p522 = scmp.eq.s32.totalorder %s49, 1
      %p523 = por %p521, %p522
      %p525 = scmp.ne.s32.totalorder %s508, %s524
      %p526 = scmp.eq.s32.totalorder %s49, 0
      %p527 = por %p525, %p526
      %s528 = ssub.s32 %s50, %s62
      %s529 = ssub.s32 %s51, %s58
      %s530 = sor.u32 %s528, %s529
      %p531 = scmp.eq.s32.totalorder %s530, 0
      %s533 = sadd.s32 %s532, 1
      %s534 = scalar_select %p531, %s532, %s533
      %p537 = pneg %p531
      %p538 = scmp.eq.s32.totalorder %s43, 1
      %p539 = por %p537, %p538
      %p540 = scmp.ne.s32.totalorder %s532, %s535
      %p541 = scmp.eq.s32.totalorder %s43, 0
      %p542 = por %p540, %p541
      %p543 = scmp.ne.s32.totalorder %s532, %s535
      %p544 = scmp.eq.s32.totalorder %s48, 1
      %p545 = por %p543, %p544
      %p546 = scmp.ne.s32.totalorder %s535, %s536
      %p547 = scmp.eq.s32.totalorder %s48, 0
      %p548 = por %p546, %p547
      %p549 = scmp.ne.s32.totalorder %s535, %s536
      %p550 = scmp.eq.s32.totalorder %s49, 1
      %p551 = por %p549, %p550
      %p553 = scmp.ne.s32.totalorder %s536, %s552
      %p554 = scmp.eq.s32.totalorder %s49, 0
      %p555 = por %p553, %p554
      %p556 = scmp.le.s32.totalorder 1, %s43
      %p557 = scmp.lt.s32.totalorder %s43, 3
      %p558 = pnand %p556, %p557
      %p559 = pneg %p558
      // Predicated region
      $region9: #{tpu_custom_call.1} parent=5 // pred_check
        _
      $region10: #{tpu_custom_call.1} parent=5 // pred_check_branch
        %561 = sbr.rel (%p558) target = $region12
      $region11: #{tpu_custom_call.1} parent=5 // pred_region
        %s562 = ssub.s32 %s43, 1
        // Predicated region
        $region13: #{tpu_custom_call.1} parent=11 // pred_check
          %p563 = pneg %p76
        $region14: #{tpu_custom_call.1} parent=11 // pred_check_branch
          %565 = sbr.rel (%p563) target = $region16
        $region15: #{tpu_custom_call.1} parent=11 // pred_region
          _
        $region16: #{tpu_custom_call.1} parent=11 // pred_fallthru
          _
        // Predicated region
        $region17: #{tpu_custom_call.1} parent=11 // pred_check
          %p566 = pneg %p177
        $region18: #{tpu_custom_call.1} parent=11 // pred_check_branch
          %568 = sbr.rel (%p566) target = $region20
        $region19: #{tpu_custom_call.1} parent=11 // pred_region
          _
        $region20: #{tpu_custom_call.1} parent=11 // pred_fallthru
          _
        // Predicated region
        $region21: #{tpu_custom_call.1} parent=11 // pred_check
          %p569 = pneg %p198
        $region22: #{tpu_custom_call.1} parent=11 // pred_check_branch
          %571 = sbr.rel (%p569) target = $region24
        $region23: #{tpu_custom_call.1} parent=11 // pred_region
          _
        $region24: #{tpu_custom_call.1} parent=11 // pred_fallthru
          _
        // Predicated region
        $region25: #{tpu_custom_call.1} parent=11 // pred_check
          %p572 = pneg %p219
        $region26: #{tpu_custom_call.1} parent=11 // pred_check_branch
          %574 = sbr.rel (%p572) target = $region28
        $region27: #{tpu_custom_call.1} parent=11 // pred_region
          _
        $region28: #{tpu_custom_call.1} parent=11 // pred_fallthru
          _
        // Predicated region
        $region29: #{tpu_custom_call.1} parent=11 // pred_check
          %p575 = pneg %p240
        $region30: #{tpu_custom_call.1} parent=11 // pred_check_branch
          %577 = sbr.rel (%p575) target = $region32
        $region31: #{tpu_custom_call.1} parent=11 // pred_region
          _
        $region32: #{tpu_custom_call.1} parent=11 // pred_fallthru
          _
        // Predicated region
        $region33: #{tpu_custom_call.1} parent=11 // pred_check
          %p578 = pneg %p261
        $region34: #{tpu_custom_call.1} parent=11 // pred_check_branch
          %580 = sbr.rel (%p578) target = $region36
        $region35: #{tpu_custom_call.1} parent=11 // pred_region
          %582 = vsyncadd [#allocation8], 0
          %s583 = sshll.u32 %s8, 4
          %s584 = int_to_ptr.hbm [resolvable:$true] %s583
          %s585 = sshll.u32 [#allocation9], 4
          %s586 = int_to_ptr.vmem [resolvable:$true] %s585
          %591 = dma.hbm_to_vmem [thread:$0]  %s584, 256, %s586, [#allocation8], 64, 64, 4
        $region36: #{tpu_custom_call.1} parent=11 // pred_fallthru
          _
        // Predicated region
        $region37: #{tpu_custom_call.1} parent=11 // pred_check
          %p592 = pneg %p282
        $region38: #{tpu_custom_call.1} parent=11 // pred_check_branch
          %594 = sbr.rel (%p592) target = $region40
        $region39: #{tpu_custom_call.1} parent=11 // pred_region
          _
        $region40: #{tpu_custom_call.1} parent=11 // pred_fallthru
          _
        // Predicated region
        $region41: #{tpu_custom_call.1} parent=11 // pred_check
          %p595 = pneg %p303
        $region42: #{tpu_custom_call.1} parent=11 // pred_check_branch
          %597 = sbr.rel (%p595) target = $region44
        $region43: #{tpu_custom_call.1} parent=11 // pred_region
          %599 = vsyncadd [#allocation11], 0
          %s600 = sshll.u32 %s10, 4
          %s601 = int_to_ptr.hbm [resolvable:$true] %s600
          %s602 = sshll.u32 [#allocation10], 4
          %s603 = int_to_ptr.vmem [resolvable:$true] %s602
          %608 = dma.hbm_to_vmem [thread:$0]  %s601, 256, %s603, [#allocation11], 64, 64, 4
        $region44: #{tpu_custom_call.1} parent=11 // pred_fallthru
          _
        // Predicated region
        $region45: #{tpu_custom_call.1} parent=11 // pred_check
          %p609 = pneg %p324
        $region46: #{tpu_custom_call.1} parent=11 // pred_check_branch
          %611 = sbr.rel (%p609) target = $region48
        $region47: #{tpu_custom_call.1} parent=11 // pred_region
          _
        $region48: #{tpu_custom_call.1} parent=11 // pred_fallthru
          _
        // Predicated region
        $region49: #{tpu_custom_call.1} parent=11 // pred_check
          %p612 = pneg %p345
        $region50: #{tpu_custom_call.1} parent=11 // pred_check_branch
          %614 = sbr.rel (%p612) target = $region52
        $region51: #{tpu_custom_call.1} parent=11 // pred_region
          %616 = vsyncadd [#allocation11], 0
          %s618 = sshll.u32 %s12, 4
          %s619 = int_to_ptr.hbm [resolvable:$true] %s618
          %s620 = sshll.u32 [#allocation12], 4
          %s621 = int_to_ptr.vmem [resolvable:$true] %s620
          %623 = dma.hbm_to_vmem [thread:$0]  %s619, 16, %s621, [#allocation11]
        $region52: #{tpu_custom_call.1} parent=11 // pred_fallthru
          _
        // Predicated region
        $region53: #{tpu_custom_call.1} parent=11 // pred_check
          %p624 = pneg %p366
        $region54: #{tpu_custom_call.1} parent=11 // pred_check_branch
          %626 = sbr.rel (%p624) target = $region56
        $region55: #{tpu_custom_call.1} parent=11 // pred_region
          %628 = vsyncadd [#allocation14], 0
          %s630 = sshll.u32 %s13, 4
          %s631 = int_to_ptr.hbm [resolvable:$true] %s630
          %s632 = sshll.u32 [#allocation13], 4
          %s633 = int_to_ptr.vmem [resolvable:$true] %s632
          %635 = dma.hbm_to_vmem [thread:$0]  %s631, 16, %s633, [#allocation14]
        $region56: #{tpu_custom_call.1} parent=11 // pred_fallthru
          _
        // Predicated region
        $region57: #{tpu_custom_call.1} parent=11 // pred_check
          %p636 = pneg %p387
        $region58: #{tpu_custom_call.1} parent=11 // pred_check_branch
          %638 = sbr.rel (%p636) target = $region60
        $region59: #{tpu_custom_call.1} parent=11 // pred_region
          %640 = vsyncadd [#allocation14], 0
          %s641 = sshll.u32 %s14, 4
          %s642 = int_to_ptr.hbm [resolvable:$true] %s641
          %s643 = sshll.u32 [#allocation15], 4
          %s644 = int_to_ptr.vmem [resolvable:$true] %s643
          %649 = dma.hbm_to_vmem [thread:$0]  %s642, 256, %s644, [#allocation14], 64, 64, 4
        $region60: #{tpu_custom_call.1} parent=11 // pred_fallthru
          _
        // Predicated region
        $region61: #{tpu_custom_call.1} parent=11 // pred_check
          %p650 = pneg %p408
        $region62: #{tpu_custom_call.1} parent=11 // pred_check_branch
          %652 = sbr.rel (%p650) target = $region64
        $region63: #{tpu_custom_call.1} parent=11 // pred_region
          %654 = vsyncadd [#allocation17], 0
          %s656 = sshll.u32 %s15, 4
          %s657 = int_to_ptr.hbm [resolvable:$true] %s656
          %s658 = sshll.u32 [#allocation16], 4
          %s659 = int_to_ptr.vmem [resolvable:$true] %s658
          %661 = dma.hbm_to_vmem [thread:$0]  %s657, 16, %s659, [#allocation17]
        $region64: #{tpu_custom_call.1} parent=11 // pred_fallthru
          _
        // Predicated region
        $region65: #{tpu_custom_call.1} parent=11 // pred_check
          %p662 = pneg %p429
        $region66: #{tpu_custom_call.1} parent=11 // pred_check_branch
          %664 = sbr.rel (%p662) target = $region68
        $region67: #{tpu_custom_call.1} parent=11 // pred_region
          _
        $region68: #{tpu_custom_call.1} parent=11 // pred_fallthru
          _
        // Predicated region
        $region69: #{tpu_custom_call.1} parent=11 // pred_check
          %p665 = pneg %p450
        $region70: #{tpu_custom_call.1} parent=11 // pred_check_branch
          %667 = sbr.rel (%p665) target = $region72
        $region71: #{tpu_custom_call.1} parent=11 // pred_region
          _
        $region72: #{tpu_custom_call.1} parent=11 // pred_fallthru
          _
        // Predicated region
        $region73: #{tpu_custom_call.1} parent=11 // pred_check
          %p668 = pneg %p471
        $region74: #{tpu_custom_call.1} parent=11 // pred_check_branch
          %670 = sbr.rel (%p668) target = $region76
        $region75: #{tpu_custom_call.1} parent=11 // pred_region
          _
        $region76: #{tpu_custom_call.1} parent=11 // pred_fallthru
          _
        // Predicated region
        $region77: #{tpu_custom_call.1} parent=11 // pred_check
          %p671 = pneg %p492
        $region78: #{tpu_custom_call.1} parent=11 // pred_check_branch
          %673 = sbr.rel (%p671) target = $region80
        $region79: #{tpu_custom_call.1} parent=11 // pred_region
          _
        $region80: #{tpu_custom_call.1} parent=11 // pred_fallthru
          _
      $region12: #{tpu_custom_call.1} parent=5 // pred_fallthru
        _
      %p674 = scmp.lt.s32.totalorder %s43, 2
      // Predicated region
      $region81: #{tpu_custom_call.1} parent=5 // pred_check
        %p675 = pneg %p674
      $region82: #{tpu_custom_call.1} parent=5 // pred_check_branch
        %677 = sbr.rel (%p675) target = $region84
      $region83: #{tpu_custom_call.1} parent=5 // pred_region
        // Predicated region
        $region85: #{tpu_custom_call.1} parent=83 // pred_check
          %p678 = pneg %p98
        $region86: #{tpu_custom_call.1} parent=83 // pred_check_branch
          %680 = sbr.rel (%p678) target = $region88
        $region87: #{tpu_custom_call.1} parent=83 // pred_region
          %p681 = scmp.lt.s32.totalorder %s50, 1
          %s682 = scalar_select %p681, %s50, 1
          %p683 = scmp.lt.s32.totalorder %s51, 0
          %s684 = scalar_select %p683, %s51, 0
          %s685 = sadd.s32 %s684, %s682
          %s686 = smul.addr %s685, 8
          %s687 = scalar_lea.vmem %s1, %s686
        $region88: #{tpu_custom_call.1} parent=83 // pred_fallthru
          _
        // Predicated region
        $region89: #{tpu_custom_call.1} parent=83 // pred_check
          %p688 = pneg %p124
        $region90: #{tpu_custom_call.1} parent=83 // pred_check_branch
          %690 = sbr.rel (%p688) target = $region92
        $region91: #{tpu_custom_call.1} parent=83 // pred_region
          %s691 = sand.u32 %s114, 1
          %s692 = scalar_lea.sflag [#allocation5], %s691
          %s693 = sand.u32 %s114, 1
          %s694 = smul.addr %s693, 4
          %s695 = scalar_lea.vmem [#allocation4], %s694
          %697 = vsyncadd %s692, 0
          %s698 = smul.addr %s50, 4
          %s699 = scalar_lea.hbm %s2, %s698
          %s701 = sshll.u32 %s699, 4
          %s702 = int_to_ptr.hbm [resolvable:$true] %s701
          %s703 = sshll.u32 %s695, 4
          %s704 = int_to_ptr.vmem [resolvable:$true] %s703
          %706 = dma.hbm_to_vmem [thread:$0]  %s702, 64, %s704, %s692
        $region92: #{tpu_custom_call.1} parent=83 // pred_fallthru
          _
        // Predicated region
        $region93: #{tpu_custom_call.1} parent=83 // pred_check
          %p707 = pneg %p150
        $region94: #{tpu_custom_call.1} parent=83 // pred_check_branch
          %709 = sbr.rel (%p707) target = $region96
        $region95: #{tpu_custom_call.1} parent=83 // pred_region
          %s710 = sand.u32 %s43, 1
          %s711 = scalar_lea.sflag [#allocation8], %s710
          %s712 = sand.u32 %s140, 1
          %s713 = smul.addr %s712, 4
          %s714 = scalar_lea.vmem [#allocation7], %s713
          %716 = vsyncadd %s711, 0
          %s717 = smul.addr %s50, 4
          %s718 = scalar_lea.hbm %s3, %s717
          %s720 = sshll.u32 %s718, 4
          %s721 = int_to_ptr.hbm [resolvable:$true] %s720
          %s722 = sshll.u32 %s714, 4
          %s723 = int_to_ptr.vmem [resolvable:$true] %s722
          %725 = dma.hbm_to_vmem [thread:$0]  %s721, 64, %s723, %s711
        $region96: #{tpu_custom_call.1} parent=83 // pred_fallthru
          _
      $region84: #{tpu_custom_call.1} parent=5 // pred_fallthru
        _
      %p726 = scmp.le.s32.totalorder 1, %s43
      %p727 = scmp.lt.s32.totalorder %s43, 3
      %p728 = pnand %p726, %p727
      %p729 = pneg %p728
      // Predicated region
      $region97: #{tpu_custom_call.1} parent=5 // pred_check
        _
      $region98: #{tpu_custom_call.1} parent=5 // pred_check_branch
        %731 = sbr.rel (%p728) target = $region100
      $region99: #{tpu_custom_call.1} parent=5 // pred_region
        %s732 = ssub.s32 %s43, 1
        %s733 = sand.u32 %s117, 1
        %s734 = scalar_lea.sflag [#allocation5], %s733
        %s735 = sand.u32 %s117, 1
        %s736 = smul.addr %s735, 4
        %s737 = scalar_lea.vmem [#allocation4], %s736
        // Predicated region
        $region101: #{tpu_custom_call.1} parent=99 // pred_check
          %p738 = pneg %p130
        $region102: #{tpu_custom_call.1} parent=99 // pred_check_branch
          %740 = sbr.rel (%p738) target = $region104
        $region103: #{tpu_custom_call.1} parent=99 // pred_region
          %742 = dma.done %s734, 64
        $region104: #{tpu_custom_call.1} parent=99 // pred_fallthru
          _
        %s743 = sand.u32 %s48, 1
        %s744 = scalar_lea.sflag [#allocation8], %s743
        %s745 = sand.u32 %s143, 1
        %s746 = smul.addr %s745, 4
        %s747 = scalar_lea.vmem [#allocation7], %s746
        // Predicated region
        $region105: #{tpu_custom_call.1} parent=99 // pred_check
          %p748 = pneg %p156
        $region106: #{tpu_custom_call.1} parent=99 // pred_check_branch
          %750 = sbr.rel (%p748) target = $region108
        $region107: #{tpu_custom_call.1} parent=99 // pred_region
          %752 = dma.done %s744, 64
        $region108: #{tpu_custom_call.1} parent=99 // pred_fallthru
          _
        // Predicated region
        $region109: #{tpu_custom_call.1} parent=99 // pred_check
          %p753 = pneg %p261
        $region110: #{tpu_custom_call.1} parent=99 // pred_check_branch
          %755 = sbr.rel (%p753) target = $region112
        $region111: #{tpu_custom_call.1} parent=99 // pred_region
          %757 = dma.done [#allocation8], 256
        $region112: #{tpu_custom_call.1} parent=99 // pred_fallthru
          _
        // Predicated region
        $region113: #{tpu_custom_call.1} parent=99 // pred_check
          %p758 = pneg %p303
        $region114: #{tpu_custom_call.1} parent=99 // pred_check_branch
          %760 = sbr.rel (%p758) target = $region116
        $region115: #{tpu_custom_call.1} parent=99 // pred_region
          %762 = dma.done [#allocation11], 256
        $region116: #{tpu_custom_call.1} parent=99 // pred_fallthru
          _
        // Predicated region
        $region117: #{tpu_custom_call.1} parent=99 // pred_check
          %p763 = pneg %p345
        $region118: #{tpu_custom_call.1} parent=99 // pred_check_branch
          %765 = sbr.rel (%p763) target = $region120
        $region119: #{tpu_custom_call.1} parent=99 // pred_region
          %767 = dma.done [#allocation11], 16
        $region120: #{tpu_custom_call.1} parent=99 // pred_fallthru
          _
        // Predicated region
        $region121: #{tpu_custom_call.1} parent=99 // pred_check
          %p768 = pneg %p366
        $region122: #{tpu_custom_call.1} parent=99 // pred_check_branch
          %770 = sbr.rel (%p768) target = $region124
        $region123: #{tpu_custom_call.1} parent=99 // pred_region
          %772 = dma.done [#allocation14], 16
        $region124: #{tpu_custom_call.1} parent=99 // pred_fallthru
          _
        // Predicated region
        $region125: #{tpu_custom_call.1} parent=99 // pred_check
          %p773 = pneg %p387
        $region126: #{tpu_custom_call.1} parent=99 // pred_check_branch
          %775 = sbr.rel (%p773) target = $region128
        $region127: #{tpu_custom_call.1} parent=99 // pred_region
          %777 = dma.done [#allocation14], 256
        $region128: #{tpu_custom_call.1} parent=99 // pred_fallthru
          _
        // Predicated region
        $region129: #{tpu_custom_call.1} parent=99 // pred_check
          %p778 = pneg %p408
        $region130: #{tpu_custom_call.1} parent=99 // pred_check_branch
          %780 = sbr.rel (%p778) target = $region132
        $region131: #{tpu_custom_call.1} parent=99 // pred_region
          %782 = dma.done [#allocation17], 16
        $region132: #{tpu_custom_call.1} parent=99 // pred_fallthru
          _
        %p783 = pneg %p76
        %p784 = pneg %p73
        %p785 = scmp.lt.s32.totalorder %s52, 1
        %s786 = scalar_select %p785, %s52, 1
        %p787 = scmp.lt.s32.totalorder %s53, 0
        %s788 = scalar_select %p787, %s53, 0
        %s789 = sadd.s32 %s788, %s786
        %s790 = smul.addr %s789, 8
        %s791 = scalar_lea.vmem %s1, %s790
        %p792 = pneg %p104
        %p793 = pneg %p101
        %s794 = sand.u32 %s117, 1
        %s795 = scalar_lea.sflag [#allocation5], %s794
        %s796 = sand.u32 %s117, 1
        %s797 = smul.addr %s796, 4
        %s798 = scalar_lea.vmem [#allocation4], %s797
        %p799 = pneg %p130
        %p800 = pneg %p127
        %s801 = sand.u32 %s48, 1
        %s802 = scalar_lea.sflag [#allocation8], %s801
        %s803 = sand.u32 %s143, 1
        %s804 = smul.addr %s803, 4
        %s805 = scalar_lea.vmem [#allocation7], %s804
        %p806 = pneg %p156
        %p807 = pneg %p153
        %p808 = pneg %p177
        %p809 = pneg %p174
        %p810 = pneg %p198
        %p811 = pneg %p195
        %p812 = pneg %p219
        %p813 = pneg %p216
        %p814 = pneg %p240
        %p815 = pneg %p237
        %p816 = pneg %p261
        %p817 = pneg %p258
        %p818 = pneg %p282
        %p819 = pneg %p279
        %p820 = pneg %p303
        %p821 = pneg %p300
        %p822 = pneg %p324
        %p823 = pneg %p321
        %p824 = pneg %p345
        %p825 = pneg %p342
        %p826 = pneg %p366
        %p827 = pneg %p363
        %p828 = pneg %p387
        %p829 = pneg %p384
        %p830 = pneg %p408
        %p831 = pneg %p405
        %p832 = pneg %p429
        %p833 = pneg %p426
        %p834 = pneg %p450
        %p835 = pneg %p447
        %p836 = pneg %p471
        %p837 = pneg %p468
        %p838 = pneg %p492
        %p839 = pneg %p489
        %p840 = pneg %p520
        %p841 = pneg %p517
        %s842 = sand.u32 %s507, 1
        %s843 = scalar_lea.sflag [#allocation6], %s842
        %s844 = sand.u32 %s507, 1
        %s845 = smul.addr %s844, 8
        %s846 = scalar_lea.vmem [#allocation18], %s845
        %p847 = pneg %p548
        %p848 = pneg %p545
        %s849 = sand.u32 %s535, 1
        %s850 = scalar_lea.sflag [#allocation20], %s849
        %s851 = sand.u32 %s535, 1
        %s852 = smul.addr %s851, 16
        %s853 = scalar_lea.vmem [#allocation19], %s852
        %p854 = scmp.lt.s32.totalorder %s52, 1
        %s855 = scalar_select %p854, %s52, 1
        %p856 = scmp.lt.s32.totalorder %s53, 0
        %s857 = scalar_select %p856, %s53, 0
        %s858 = sadd.s32 %s857, %s855
        %s859 = smul.addr %s858, 8
        %s860 = scalar_lea.vmem %s1, %s859
        %p862 = scmp.eq.s32.totalorder %s53, 0
        // Predicated region
        $region133: #{tpu_custom_call.1} parent=99 // pred_check
          %p863 = pneg %p862
        $region134: #{tpu_custom_call.1} parent=99 // pred_check_branch
          %865 = sbr.rel (%p863) target = $region136
        $region135: #{tpu_custom_call.1} parent=99 // pred_region
          %v866 = vld [vmem:[%s737] sm:$0xf]
          %v867 = vld [vmem:[%s6] sm:$0xf]
          %v868 = vld [vmem:[%s6 + $0x4] sm:$0xf]
          %v869 = vld [vmem:[%s6 + $0x8] sm:$0xf]
          %v870 = vld [vmem:[%s6 + $0xc] sm:$0xf]
          %v871 = vld [vmem:[%s7] sm:$0x1]
          %v873 = vperm.slane %v871, 0
          %v879 = vunpack.c.l.b16 %v867
          %v880 = vunpack.c.l.b16 %v868
          %v881 = vunpack.c.l.b16 %v869
          %v882 = vunpack.c.l.b16 %v870
          %v883 = vpack.c.b16 %v880, %v879
          %v884 = vpack.c.b16 %v882, %v881
          %vm887 = vcmask 261120
          %v889 = vsel %vm887, %v866, 0
          %891 = vmatpush.bf16.msra.mxu0 0
          %892 = vmatpush.bf16.msra.mxu0 0
          %893 = vmatpush.bf16.msra.mxu0 0
          %894 = vmatpush.bf16.msra.mxu0 0
          %895 = vmatpush.bf16.msra.mxu0 0
          %896 = vmatpush.bf16.msra.mxu0 0
          %897 = vmatpush.bf16.msra.mxu0 %v884
          %898 = vmatpush.bf16.msra.mxu0 %v883
          %899 = vmatmul.bf16.gmra.mxu0 %v889
          %v900 = vpop.f32.mrf.mxu0
          %v901 = vadd.f32 %v873, %v900
          %v902 = vpop.f32.mrf.mxu0
          %903 = vdwg.mxu0
          %v904 = vld [vmem:[%s747] sm:$0xf]
          %v905 = vld [vmem:[#allocation9] sm:$0xf]
          %v906 = vld [vmem:[#allocation9 + $0x4] sm:$0xf]
          %v907 = vld [vmem:[#allocation9 + $0x8] sm:$0xf]
          %v908 = vld [vmem:[#allocation9 + $0xc] sm:$0xf]
          %v909 = vld [vmem:[%s9] sm:$0x1]
          %v911 = vperm.slane %v909, 0
          %v917 = vunpack.c.l.b16 %v905
          %v918 = vunpack.c.l.b16 %v906
          %v919 = vunpack.c.l.b16 %v907
          %v920 = vunpack.c.l.b16 %v908
          %v921 = vpack.c.b16 %v918, %v917
          %v922 = vpack.c.b16 %v920, %v919
          %v926 = vsel %vm887, %v904, 0
          %928 = vmatpush.bf16.msra.mxu0 0
          %929 = vmatpush.bf16.msra.mxu0 0
          %930 = vmatpush.bf16.msra.mxu0 0
          %931 = vmatpush.bf16.msra.mxu0 0
          %932 = vmatpush.bf16.msra.mxu0 0
          %933 = vmatpush.bf16.msra.mxu0 0
          %934 = vmatpush.bf16.msra.mxu0 %v922
          %935 = vmatpush.bf16.msra.mxu0 %v921
          %936 = vmatmul.bf16.gmra.mxu0 %v926
          %v937 = vpop.f32.mrf.mxu0
          %v938 = vadd.f32 %v911, %v937
          %v939 = vpop.f32.mrf.mxu0
          %940 = vdwg.mxu0
          %v941 = vpack.c.bf16 %v901, %v901
          %943 = vrot.lane.b32.xlu0 %v941, 120
          %v944 = vpop.permute.xlu0 %943
          %946 = vrot.lane.b32.xlu0 %v941, 112
          %v947 = vpop.permute.xlu0 %946
          %949 = vrot.lane.b32.xlu0 %v941, 104
          %v950 = vpop.permute.xlu0 %949
          %vm952 = vcmask 60416
          %953 = vst.msk [vmem:[#allocation2] sm:$0xf] %vm952, %v941
          %954 = vst.msk [vmem:[#allocation2 + $0x4] sm:$0xf] %vm952, %v944
          %955 = vst.msk [vmem:[#allocation2 + $0x8] sm:$0xf] %vm952, %v947
          %956 = vst.msk [vmem:[#allocation2 + $0xc] sm:$0xf] %vm952, %v950
          %v957 = vpack.c.bf16 %v938, %v938
          %959 = vrot.lane.b32.xlu0 %v957, 120
          %v960 = vpop.permute.xlu0 %959
          %962 = vrot.lane.b32.xlu0 %v957, 112
          %v963 = vpop.permute.xlu0 %962
          %965 = vrot.lane.b32.xlu0 %v957, 104
          %v966 = vpop.permute.xlu0 %965
          %968 = vst.msk [vmem:[#allocation3] sm:$0xf] %vm952, %v957
          %969 = vst.msk [vmem:[#allocation3 + $0x4] sm:$0xf] %vm952, %v960
          %970 = vst.msk [vmem:[#allocation3 + $0x8] sm:$0xf] %vm952, %v963
          %971 = vst.msk [vmem:[#allocation3 + $0xc] sm:$0xf] %vm952, %v966
        $region136: #{tpu_custom_call.1} parent=99 // pred_fallthru
          _
        %v972 = vld [vmem:[%s860] sm:$0xff]
        %v973 = vpack.c.bf16 %v972, %v972
        %v974 = vld [vmem:[%s4] sm:$0xf]
        %v975 = vld [vmem:[%s4 + $0x4] sm:$0xf]
        %v976 = vld [vmem:[%s4 + $0x8] sm:$0xf]
        %v977 = vld [vmem:[%s4 + $0xc] sm:$0xf]
        %v978 = vld [vmem:[%s5] sm:$0x1]
        %v980 = vperm.slane %v978, 0
        %v986 = vunpack.c.l.b16 %v974
        %v987 = vunpack.c.l.b16 %v975
        %v988 = vunpack.c.l.b16 %v976
        %v989 = vunpack.c.l.b16 %v977
        %v990 = vpack.c.b16 %v987, %v986
        %v991 = vpack.c.b16 %v989, %v988
        %vm994 = vcmask 261120
        %v996 = vsel %vm994, %v973, 0
        %998 = vmatpush.bf16.msra.mxu0 0
        %999 = vmatpush.bf16.msra.mxu0 0
        %1000 = vmatpush.bf16.msra.mxu0 0
        %1001 = vmatpush.bf16.msra.mxu0 0
        %1002 = vmatpush.bf16.msra.mxu0 0
        %1003 = vmatpush.bf16.msra.mxu0 0
        %1004 = vmatpush.bf16.msra.mxu0 %v991
        %1005 = vmatpush.bf16.msra.mxu0 %v990
        %1006 = vmatmul.bf16.gmra.mxu0 %v996
        %v1007 = vpop.f32.mrf.mxu0
        %v1008 = vadd.f32 %v980, %v1007
        %v1009 = vpop.f32.mrf.mxu0
        %1010 = vdwg.mxu0
        %v1011 = vpack.c.bf16 %v1008, %v1008
        %1013 = vrot.lane.b32.xlu0 %v1011, 120
        %v1014 = vpop.permute.xlu0 %1013
        %1015 = vrot.lane.b32.xlu0 %v1011, 112
        %v1016 = vpop.permute.xlu0 %1015
        %1017 = vrot.lane.b32.xlu0 %v1011, 104
        %v1018 = vpop.permute.xlu0 %1017
        %v1019 = vld [vmem:[#allocation2] sm:$0xf]
        %v1020 = vld [vmem:[#allocation2 + $0x4] sm:$0xf]
        %v1021 = vld [vmem:[#allocation2 + $0x8] sm:$0xf]
        %v1022 = vld [vmem:[#allocation2 + $0xc] sm:$0xf]
        %v1023 = vld [vmem:[#allocation3] sm:$0xf]
        %v1024 = vld [vmem:[#allocation3 + $0x4] sm:$0xf]
        %v1025 = vld [vmem:[#allocation3 + $0x8] sm:$0xf]
        %v1026 = vld [vmem:[#allocation3 + $0xc] sm:$0xf]
        %vm1027 = vcmask 64512
        %v1029 = vsel %vm1027, %v1011, 0
        %v1032 = vsel %vm1027, %v1019, 0
        %1034 = vmatpush.bf16.xpose.msra.mxu0 0
        %1035 = vmatpush.bf16.xpose.msra.mxu0 0
        %1036 = vmatpush.bf16.xpose.msra.mxu0 0
        %1037 = vmatpush.bf16.xpose.msra.mxu0 0
        %1038 = vmatpush.bf16.xpose.msra.mxu0 0
        %1039 = vmatpush.bf16.xpose.msra.mxu0 0
        %1040 = vmatpush.bf16.xpose.msra.mxu0 0
        %1041 = vmatpush.bf16.xpose.msra.mxu0 %v1032
        %1042 = vmatmul.bf16.gmra.mxu0 %v1029
        %v1043 = vpop.f32.mrf.mxu0
        %v1044 = vadd.f32 0.0, %v1043
        %v1045 = vpop.f32.mrf.mxu0
        %1046 = vdwg.mxu0
        %v1048 = vsel %vm1027, %v1014, 0
        %v1051 = vsel %vm1027, %v1020, 0
        %1053 = vmatpush.bf16.xpose.msra.mxu0 0
        %1054 = vmatpush.bf16.xpose.msra.mxu0 0
        %1055 = vmatpush.bf16.xpose.msra.mxu0 0
        %1056 = vmatpush.bf16.xpose.msra.mxu0 0
        %1057 = vmatpush.bf16.xpose.msra.mxu0 0
        %1058 = vmatpush.bf16.xpose.msra.mxu0 0
        %1059 = vmatpush.bf16.xpose.msra.mxu0 0
        %1060 = vmatpush.bf16.xpose.msra.mxu0 %v1051
        %1061 = vmatmul.bf16.gmra.mxu0 %v1048
        %v1062 = vpop.f32.mrf.mxu0
        %v1063 = vadd.f32 0.0, %v1062
        %v1064 = vpop.f32.mrf.mxu0
        %1065 = vdwg.mxu0
        %v1067 = vsel %vm1027, %v1016, 0
        %v1070 = vsel %vm1027, %v1021, 0
        %1072 = vmatpush.bf16.xpose.msra.mxu0 0
        %1073 = vmatpush.bf16.xpose.msra.mxu0 0
        %1074 = vmatpush.bf16.xpose.msra.mxu0 0
        %1075 = vmatpush.bf16.xpose.msra.mxu0 0
        %1076 = vmatpush.bf16.xpose.msra.mxu0 0
        %1077 = vmatpush.bf16.xpose.msra.mxu0 0
        %1078 = vmatpush.bf16.xpose.msra.mxu0 0
        %1079 = vmatpush.bf16.xpose.msra.mxu0 %v1070
        %1080 = vmatmul.bf16.gmra.mxu0 %v1067
        %v1081 = vpop.f32.mrf.mxu0
        %v1082 = vadd.f32 0.0, %v1081
        %v1083 = vpop.f32.mrf.mxu0
        %1084 = vdwg.mxu0
        %v1086 = vsel %vm1027, %v1018, 0
        %v1089 = vsel %vm1027, %v1022, 0
        %1091 = vmatpush.bf16.xpose.msra.mxu0 0
        %1092 = vmatpush.bf16.xpose.msra.mxu0 0
        %1093 = vmatpush.bf16.xpose.msra.mxu0 0
        %1094 = vmatpush.bf16.xpose.msra.mxu0 0
        %1095 = vmatpush.bf16.xpose.msra.mxu0 0
        %1096 = vmatpush.bf16.xpose.msra.mxu0 0
        %1097 = vmatpush.bf16.xpose.msra.mxu0 0
        %1098 = vmatpush.bf16.xpose.msra.mxu0 %v1089
        %1099 = vmatmul.bf16.gmra.mxu0 %v1086
        %v1100 = vpop.f32.mrf.mxu0
        %v1101 = vadd.f32 0.0, %v1100
        %v1102 = vpop.f32.mrf.mxu0
        %1103 = vdwg.mxu0
        %s1104 = smul.u32 %s53, 8
        %v1105 = vlaneseq
        %v1106 = vshrl.u32 %v1105, 7
        %v1107 = vstv %s1104
        %v1108 = vadd.s32 %v1107, %v1106
        %v1109 = vlaneseq
        %v1110 = vand.u32 %v1109, 127
        %v1111 = vsub.s32 %v1108, %v1110
        %v1112 = vcvt.s32.f32 %v1111
        %v1113 = vand.u32 2147483647, %v1112
        %v1114 = vmul.f32 %v1113, 0.04761905
        %v1115 = vld [vmem:[%s0] sm:$0xf]
        %v1117 = vrot.slane %v1115, 1
        %v1118 = vrot.slane %v1115, 2
        %v1119 = vrot.slane %v1115, 3
        %v1120 = vperm.slane %v1115, 0
        %v1121 = vperm.slane %v1117, 0
        %v1122 = vperm.slane %v1118, 0
        %v1123 = vperm.slane %v1119, 0
        %1124 = vset.pattern.permute.xlu0 0
        %1125 = vperm.xlu0 %1124, %v1120
        %v1126 = vpop.permute.xlu0 %1125
        %1128 = vset.pattern.permute.xlu0 0
        %1129 = vperm.xlu0 %1128, %v1121
        %v1130 = vpop.permute.xlu0 %1129
        %1132 = vset.pattern.permute.xlu0 0
        %1133 = vperm.xlu0 %1132, %v1122
        %v1134 = vpop.permute.xlu0 %1133
        %1136 = vset.pattern.permute.xlu0 0
        %1137 = vperm.xlu0 %1136, %v1123
        %v1138 = vpop.permute.xlu0 %1137
        %v1140 = vmul.f32 %v1114, %v1126
        %v1141 = vmul.f32 %v1114, %v1130
        %v1142 = vmul.f32 %v1114, %v1134
        %v1143 = vmul.f32 %v1114, %v1138
        %v1144 = vmul.f32 %v1140, 1.442695
        %v1145 = vpow.pop %v1144
        %v1146 = vmul.f32 %v1141, 1.442695
        %v1147 = vpow.pop %v1146
        %v1148 = vmul.f32 %v1142, 1.442695
        %v1149 = vpow.pop %v1148
        %v1150 = vmul.f32 %v1143, 1.442695
        %v1151 = vpow.pop %v1150
        %v1152 = vmax.f32 %v1145, 1e-05
        %v1153 = vmax.f32 %v1147, 1e-05
        %v1154 = vmax.f32 %v1149, 1e-05
        %v1155 = vmax.f32 %v1151, 1e-05
        %v1156 = vmin.f32 %v1152, 100000.0
        %v1157 = vmin.f32 %v1153, 100000.0
        %v1158 = vmin.f32 %v1154, 100000.0
        %v1159 = vmin.f32 %v1155, 100000.0
        %v1160 = vmul.f32 %v1044, %v1156
        %v1161 = vmul.f32 %v1063, %v1157
        %v1162 = vmul.f32 %v1082, %v1158
        %v1163 = vmul.f32 %v1101, %v1159
        %vm1164 = vcmp.le.s32.totalorder %v1110, %v1108
        %v1165 = vsel %vm1164, 1, 0
        %vm1166 = vcmp.eq.s32.totalorder %v1165, 1
        %v1167 = vsel %vm1166, %v1160, -1e+32
        %v1168 = vsel %vm1166, %v1161, -1e+32
        %v1169 = vsel %vm1166, %v1162, -1e+32
        %v1170 = vsel %vm1166, %v1163, -1e+32
        %v1171 = vsel %vm1027, %v1167, -inf
        %1172 = vmax.xlane.f32.xlu0 %v1171
        %v1173 = vpop.xlane.xlu0 %1172
        %v1174 = vsel %vm1027, %v1168, -inf
        %1175 = vmax.xlane.f32.xlu0 %v1174
        %v1176 = vpop.xlane.xlu0 %1175
        %v1177 = vsel %vm1027, %v1169, -inf
        %1178 = vmax.xlane.f32.xlu0 %v1177
        %v1179 = vpop.xlane.xlu0 %1178
        %v1180 = vsel %vm1027, %v1170, -inf
        %1181 = vmax.xlane.f32.xlu0 %v1180
        %v1182 = vpop.xlane.xlu0 %1181
        %v1183 = vsub.f32 %v1167, %v1173
        %v1184 = vsub.f32 %v1168, %v1176
        %v1185 = vsub.f32 %v1169, %v1179
        %v1186 = vsub.f32 %v1170, %v1182
        %v1187 = vmul.f32 %v1183, 1.442695
        %v1188 = vpow.pop %v1187
        %v1189 = vmul.f32 %v1184, 1.442695
        %v1190 = vpow.pop %v1189
        %v1191 = vmul.f32 %v1185, 1.442695
        %v1192 = vpow.pop %v1191
        %v1193 = vmul.f32 %v1186, 1.442695
        %v1194 = vpow.pop %v1193
        %v1195 = vsel %vm1027, %v1188, 0.0
        %1196 = vadd.xlane.f32.xlu0 %v1195
        %v1197 = vpop.xlane.xlu0 %1196
        %v1198 = vsel %vm1027, %v1190, 0.0
        %1199 = vadd.xlane.f32.xlu0 %v1198
        %v1200 = vpop.xlane.xlu0 %1199
        %v1201 = vsel %vm1027, %v1192, 0.0
        %1202 = vadd.xlane.f32.xlu0 %v1201
        %v1203 = vpop.xlane.xlu0 %1202
        %v1204 = vsel %vm1027, %v1194, 0.0
        %1205 = vadd.xlane.f32.xlu0 %v1204
        %v1206 = vpop.xlane.xlu0 %1205
        %v1207 = vrcp.pop %v1197
        %v1208 = vrcp.pop %v1200
        %v1209 = vrcp.pop %v1203
        %v1210 = vrcp.pop %v1206
        %v1211 = vmul.f32 %v1188, %v1207
        %v1212 = vmul.f32 %v1190, %v1208
        %v1213 = vmul.f32 %v1192, %v1209
        %v1214 = vmul.f32 %v1194, %v1210
        %v1215 = vpack.c.bf16 %v1211, %v1211
        %v1216 = vpack.c.bf16 %v1212, %v1212
        %v1217 = vpack.c.bf16 %v1213, %v1213
        %v1218 = vpack.c.bf16 %v1214, %v1214
        %vm1219 = vcmask 60416
        %1220 = vst.msk [vmem:[%s853] sm:$0xf] %vm1219, %v1215
        %1221 = vst.msk [vmem:[%s853 + $0x4] sm:$0xf] %vm1219, %v1216
        %1222 = vst.msk [vmem:[%s853 + $0x8] sm:$0xf] %vm1219, %v1217
        %1223 = vst.msk [vmem:[%s853 + $0xc] sm:$0xf] %vm1219, %v1218
        %v1225 = vsel %vm1027, %v1215, 0
        %vm1227 = vcmask 1043456
        %v1229 = vsel %vm1227, %v1023, 0
        %1231 = vmatpush.bf16.msra.mxu0 0
        %1232 = vmatpush.bf16.msra.mxu0 0
        %1233 = vmatpush.bf16.msra.mxu0 0
        %1234 = vmatpush.bf16.msra.mxu0 0
        %1235 = vmatpush.bf16.msra.mxu0 0
        %1236 = vmatpush.bf16.msra.mxu0 0
        %1237 = vmatpush.bf16.msra.mxu0 0
        %1238 = vmatpush.bf16.msra.mxu0 %v1229
        %1239 = vmatmul.bf16.gmra.mxu0 %v1225
        %v1240 = vpop.f32.mrf.mxu0
        %v1241 = vadd.f32 0.0, %v1240
        %v1242 = vpop.f32.mrf.mxu0
        %1243 = vdwg.mxu0
        %v1245 = vsel %vm1027, %v1216, 0
        %v1248 = vsel %vm1227, %v1024, 0
        %1250 = vmatpush.bf16.msra.mxu0 0
        %1251 = vmatpush.bf16.msra.mxu0 0
        %1252 = vmatpush.bf16.msra.mxu0 0
        %1253 = vmatpush.bf16.msra.mxu0 0
        %1254 = vmatpush.bf16.msra.mxu0 0
        %1255 = vmatpush.bf16.msra.mxu0 0
        %1256 = vmatpush.bf16.msra.mxu0 0
        %1257 = vmatpush.bf16.msra.mxu0 %v1248
        %1258 = vmatmul.bf16.gmra.mxu0 %v1245
        %v1259 = vpop.f32.mrf.mxu0
        %v1260 = vadd.f32 0.0, %v1259
        %v1261 = vpop.f32.mrf.mxu0
        %1262 = vdwg.mxu0
        %v1264 = vsel %vm1027, %v1217, 0
        %v1267 = vsel %vm1227, %v1025, 0
        %1269 = vmatpush.bf16.msra.mxu0 0
        %1270 = vmatpush.bf16.msra.mxu0 0
        %1271 = vmatpush.bf16.msra.mxu0 0
        %1272 = vmatpush.bf16.msra.mxu0 0
        %1273 = vmatpush.bf16.msra.mxu0 0
        %1274 = vmatpush.bf16.msra.mxu0 0
        %1275 = vmatpush.bf16.msra.mxu0 0
        %1276 = vmatpush.bf16.msra.mxu0 %v1267
        %1277 = vmatmul.bf16.gmra.mxu0 %v1264
        %v1278 = vpop.f32.mrf.mxu0
        %v1279 = vadd.f32 0.0, %v1278
        %v1280 = vpop.f32.mrf.mxu0
        %1281 = vdwg.mxu0
        %v1283 = vsel %vm1027, %v1218, 0
        %v1286 = vsel %vm1227, %v1026, 0
        %1288 = vmatpush.bf16.msra.mxu0 0
        %1289 = vmatpush.bf16.msra.mxu0 0
        %1290 = vmatpush.bf16.msra.mxu0 0
        %1291 = vmatpush.bf16.msra.mxu0 0
        %1292 = vmatpush.bf16.msra.mxu0 0
        %1293 = vmatpush.bf16.msra.mxu0 0
        %1294 = vmatpush.bf16.msra.mxu0 0
        %1295 = vmatpush.bf16.msra.mxu0 %v1286
        %1296 = vmatmul.bf16.gmra.mxu0 %v1283
        %v1297 = vpop.f32.mrf.mxu0
        %v1298 = vadd.f32 0.0, %v1297
        %v1299 = vpop.f32.mrf.mxu0
        %1300 = vdwg.mxu0
        %v1301 = vpack.c.bf16 %v1241, %v1241
        %v1302 = vpack.c.bf16 %v1260, %v1260
        %v1303 = vpack.c.bf16 %v1279, %v1279
        %v1304 = vpack.c.bf16 %v1298, %v1298
        %v1305 = vld [vmem:[#allocation10] sm:$0xf]
        %v1306 = vld [vmem:[#allocation10 + $0x4] sm:$0xf]
        %v1307 = vld [vmem:[#allocation10 + $0x8] sm:$0xf]
        %v1308 = vld [vmem:[#allocation10 + $0xc] sm:$0xf]
        %v1310 = vsel %vm1027, %v1301, 0
        %v1313 = vsel %vm1227, %v1305, 0
        %1315 = vmatpush.bf16.msra.mxu0 0
        %1316 = vmatpush.bf16.msra.mxu0 0
        %1317 = vmatpush.bf16.msra.mxu0 0
        %1318 = vmatpush.bf16.msra.mxu0 0
        %1319 = vmatpush.bf16.msra.mxu0 0
        %1320 = vmatpush.bf16.msra.mxu0 0
        %1321 = vmatpush.bf16.msra.mxu0 0
        %1322 = vmatpush.bf16.msra.mxu0 %v1313
        %1323 = vmatmul.bf16.gmra.mxu0 %v1310
        %v1324 = vpop.f32.mrf.mxu0
        %v1325 = vadd.f32 0.0, %v1324
        %v1326 = vpop.f32.mrf.mxu0
        %1327 = vdwg.mxu0
        %v1329 = vsel %vm1027, %v1302, 0
        %v1332 = vsel %vm1227, %v1306, 0
        %1334 = vmatpush.bf16.msra.mxu0 0
        %1335 = vmatpush.bf16.msra.mxu0 0
        %1336 = vmatpush.bf16.msra.mxu0 0
        %1337 = vmatpush.bf16.msra.mxu0 0
        %1338 = vmatpush.bf16.msra.mxu0 0
        %1339 = vmatpush.bf16.msra.mxu0 0
        %1340 = vmatpush.bf16.msra.mxu0 0
        %1341 = vmatpush.bf16.msra.mxu0 %v1332
        %1342 = vmatmul.bf16.gmra.mxu0 %v1329
        %v1343 = vpop.f32.mrf.mxu0
        %v1344 = vadd.f32 0.0, %v1343
        %v1345 = vpop.f32.mrf.mxu0
        %1346 = vdwg.mxu0
        %v1348 = vsel %vm1027, %v1303, 0
        %v1351 = vsel %vm1227, %v1307, 0
        %1353 = vmatpush.bf16.msra.mxu0 0
        %1354 = vmatpush.bf16.msra.mxu0 0
        %1355 = vmatpush.bf16.msra.mxu0 0
        %1356 = vmatpush.bf16.msra.mxu0 0
        %1357 = vmatpush.bf16.msra.mxu0 0
        %1358 = vmatpush.bf16.msra.mxu0 0
        %1359 = vmatpush.bf16.msra.mxu0 0
        %1360 = vmatpush.bf16.msra.mxu0 %v1351
        %1361 = vmatmul.bf16.gmra.mxu0 %v1348
        %v1362 = vpop.f32.mrf.mxu0
        %v1363 = vadd.f32 0.0, %v1362
        %v1364 = vpop.f32.mrf.mxu0
        %1365 = vdwg.mxu0
        %v1367 = vsel %vm1027, %v1304, 0
        %v1370 = vsel %vm1227, %v1308, 0
        %1372 = vmatpush.bf16.msra.mxu0 0
        %1373 = vmatpush.bf16.msra.mxu0 0
        %1374 = vmatpush.bf16.msra.mxu0 0
        %1375 = vmatpush.bf16.msra.mxu0 0
        %1376 = vmatpush.bf16.msra.mxu0 0
        %1377 = vmatpush.bf16.msra.mxu0 0
        %1378 = vmatpush.bf16.msra.mxu0 0
        %1379 = vmatpush.bf16.msra.mxu0 %v1370
        %1380 = vmatmul.bf16.gmra.mxu0 %v1367
        %v1381 = vpop.f32.mrf.mxu0
        %v1382 = vadd.f32 0.0, %v1381
        %v1383 = vpop.f32.mrf.mxu0
        %1384 = vdwg.mxu0
        %v1385 = vsel %vm994, %v1325, 0.0
        %v1386 = vsel %vm994, %v1344, 0.0
        %v1387 = vadd.f32 %v1385, %v1386
        %v1388 = vsel %vm994, %v1363, 0.0
        %v1389 = vadd.f32 %v1387, %v1388
        %v1390 = vsel %vm994, %v1382, 0.0
        %v1391 = vadd.f32 %v1389, %v1390
        %v1392 = vld [vmem:[%s11] sm:$0x1]
        %v1394 = vperm.slane %v1392, 0
        %v1396 = vadd.f32 %v1391, %v1394
        %v1397 = vadd.f32 %v972, %v1396
        %v1398 = vsel %vm994, %v1397, 0.0
        %1399 = vadd.xlane.f32.xlu0 %v1398
        %v1400 = vpop.xlane.xlu0 %1399
        %v1401 = vrcp.pop 32.0
        %v1402 = vmul.f32 32.0, %v1401
        %v1403 = vsub.f32 1.0, %v1402
        %v1404 = vmul.f32 %v1401, %v1403
        %v1405 = vadd.f32 %v1401, %v1404
        %vm1406 = vweird.f32 %v1401
        %v1407 = vsel %vm1406, %v1401, %v1405
        %v1408 = vmul.f32 %v1400, %v1407
        %v1409 = vsub.f32 %v1397, %v1408
        %v1410 = vmul.f32 %v1409, %v1409
        %v1411 = vsel %vm994, %v1410, 0.0
        %1412 = vadd.xlane.f32.xlu0 %v1411
        %v1413 = vpop.xlane.xlu0 %1412
        %v1414 = vmul.f32 %v1413, %v1407
        %v1415 = vadd.f32 %v1414, 1e-05
        %v1416 = vrsqrt.pop %v1415
        %v1417 = vmul.f32 %v1416, %v1415
        %v1418 = vmul.f32 %v1417, %v1416
        %v1419 = vmul.f32 0.5, %v1418
        %v1420 = vsub.f32 1.5, %v1419
        %v1421 = vmul.f32 %v1416, %v1420
        %vm1422 = vweird.f32 %v1415
        %vm1423 = vweird.f32 %v1416
        %vm1424 = vmor %vm1422, %vm1423
        %v1425 = vsel %vm1424, %v1416, %v1421
        %v1426 = vmul.f32 %v1409, %v1425
        %v1427 = vld [vmem:[#allocation12] sm:$0x1]
        %v1429 = vperm.slane %v1427, 0
        %v1431 = vmul.f32 %v1426, %v1429
        %v1432 = vld [vmem:[#allocation13] sm:$0x1]
        %v1434 = vperm.slane %v1432, 0
        %v1436 = vadd.f32 %v1431, %v1434
        %v1437 = vpack.c.bf16 %v1436, %v1436
        %v1438 = vld [vmem:[#allocation15] sm:$0xf]
        %v1439 = vld [vmem:[#allocation15 + $0x4] sm:$0xf]
        %v1440 = vld [vmem:[#allocation15 + $0x8] sm:$0xf]
        %v1441 = vld [vmem:[#allocation15 + $0xc] sm:$0xf]
        %v1442 = vld [vmem:[#allocation16] sm:$0x1]
        %v1444 = vperm.slane %v1442, 0
        %v1450 = vunpack.c.l.b16 %v1438
        %v1451 = vunpack.c.l.b16 %v1439
        %v1452 = vunpack.c.l.b16 %v1440
        %v1453 = vunpack.c.l.b16 %v1441
        %v1454 = vpack.c.b16 %v1451, %v1450
        %v1455 = vpack.c.b16 %v1453, %v1452
        %v1459 = vsel %vm994, %v1437, 0
        %1461 = vmatpush.bf16.msra.mxu0 0
        %1462 = vmatpush.bf16.msra.mxu0 0
        %1463 = vmatpush.bf16.msra.mxu0 0
        %1464 = vmatpush.bf16.msra.mxu0 0
        %1465 = vmatpush.bf16.msra.mxu0 0
        %1466 = vmatpush.bf16.msra.mxu0 0
        %1467 = vmatpush.bf16.msra.mxu0 %v1455
        %1468 = vmatpush.bf16.msra.mxu0 %v1454
        %1469 = vmatmul.bf16.gmra.mxu0 %v1459
        %v1470 = vpop.f32.mrf.mxu0
        %v1471 = vadd.f32 %v1444, %v1470
        %v1472 = vpop.f32.mrf.mxu0
        %1473 = vdwg.mxu0
        %v1474 = vmax.f32 %v1471, 0.0
        %v1475 = vpack.c.bf16 %v1474, %v1474
        %v1476 = vld [vmem:[%s16] sm:$0xf]
        %v1477 = vld [vmem:[%s16 + $0x4] sm:$0xf]
        %v1478 = vld [vmem:[%s16 + $0x8] sm:$0xf]
        %v1479 = vld [vmem:[%s16 + $0xc] sm:$0xf]
        %v1480 = vld [vmem:[%s16 + $0x10] sm:$0xf]
        %v1481 = vld [vmem:[%s16 + $0x14] sm:$0xf]
        %v1482 = vld [vmem:[%s16 + $0x18] sm:$0xf]
        %v1483 = vld [vmem:[%s16 + $0x1c] sm:$0xf]
        %v1484 = vld [vmem:[%s17] sm:$0x1]
        %v1486 = vperm.slane %v1484, 0
        %v1496 = vunpack.c.l.b16 %v1476
        %v1497 = vunpack.c.l.b16 %v1477
        %v1498 = vunpack.c.l.b16 %v1478
        %v1499 = vunpack.c.l.b16 %v1479
        %v1500 = vunpack.c.l.b16 %v1480
        %v1501 = vunpack.c.l.b16 %v1481
        %v1502 = vunpack.c.l.b16 %v1482
        %v1503 = vunpack.c.l.b16 %v1483
        %v1504 = vpack.c.b16 %v1497, %v1496
        %v1505 = vpack.c.b16 %v1499, %v1498
        %v1506 = vpack.c.b16 %v1501, %v1500
        %v1507 = vpack.c.b16 %v1503, %v1502
        %vm1512 = vcmask 523264
        %v1514 = vsel %vm1512, %v1475, 0
        %1516 = vmatpush.bf16.msra.mxu0 0
        %1517 = vmatpush.bf16.msra.mxu0 0
        %1518 = vmatpush.bf16.msra.mxu0 0
        %1519 = vmatpush.bf16.msra.mxu0 0
        %1520 = vmatpush.bf16.msra.mxu0 %v1507
        %1521 = vmatpush.bf16.msra.mxu0 %v1506
        %1522 = vmatpush.bf16.msra.mxu0 %v1505
        %1523 = vmatpush.bf16.msra.mxu0 %v1504
        %1524 = vmatmul.bf16.gmra.mxu0 %v1514
        %v1525 = vpop.f32.mrf.mxu0
        %v1526 = vadd.f32 %v1486, %v1525
        %v1527 = vpop.f32.mrf.mxu0
        %1528 = vdwg.mxu0
        %v1529 = vadd.f32 %v1436, %v1526
        %v1530 = vsel %vm994, %v1529, 0.0
        %1531 = vadd.xlane.f32.xlu0 %v1530
        %v1532 = vpop.xlane.xlu0 %1531
        %v1533 = vmul.f32 %v1532, %v1407
        %v1534 = vsub.f32 %v1529, %v1533
        %v1535 = vmul.f32 %v1534, %v1534
        %v1536 = vsel %vm994, %v1535, 0.0
        %1537 = vadd.xlane.f32.xlu0 %v1536
        %v1538 = vpop.xlane.xlu0 %1537
        %v1539 = vmul.f32 %v1538, %v1407
        %v1540 = vadd.f32 %v1539, 1e-05
        %v1541 = vrsqrt.pop %v1540
        %v1542 = vmul.f32 %v1541, %v1540
        %v1543 = vmul.f32 %v1542, %v1541
        %v1544 = vmul.f32 0.5, %v1543
        %v1545 = vsub.f32 1.5, %v1544
        %v1546 = vmul.f32 %v1541, %v1545
        %vm1547 = vweird.f32 %v1540
        %vm1548 = vweird.f32 %v1541
        %vm1549 = vmor %vm1547, %vm1548
        %v1550 = vsel %vm1549, %v1541, %v1546
        %v1551 = vmul.f32 %v1534, %v1550
        %v1552 = vld [vmem:[%s18] sm:$0x1]
        %v1554 = vperm.slane %v1552, 0
        %v1556 = vmul.f32 %v1551, %v1554
        %v1557 = vld [vmem:[%s19] sm:$0x1]
        %v1559 = vperm.slane %v1557, 0
        %v1561 = vadd.f32 %v1556, %v1559
        %1562 = vst.msk [vmem:[%s846] sm:$0xff] %vm994, %v1561
        %s1563 = sand.u32 %s507, 1
        %s1564 = scalar_lea.sflag [#allocation6], %s1563
        %s1565 = sand.u32 %s507, 1
        %s1566 = smul.addr %s1565, 8
        %s1567 = scalar_lea.vmem [#allocation18], %s1566
        %s1568 = sand.u32 %s535, 1
        %s1569 = scalar_lea.sflag [#allocation20], %s1568
        %s1570 = sand.u32 %s535, 1
        %s1571 = smul.addr %s1570, 16
        %s1572 = scalar_lea.vmem [#allocation19], %s1571
        // Predicated region
        $region137: #{tpu_custom_call.1} parent=99 // pred_check
          %p1573 = pneg %p517
        $region138: #{tpu_custom_call.1} parent=99 // pred_check_branch
          %1575 = sbr.rel (%p1573) target = $region140
        $region139: #{tpu_custom_call.1} parent=99 // pred_region
          %1577 = vsyncadd %s1564, 0
          %s1578 = sadd.s32 %s53, %s52
          %s1579 = smul.addr %s1578, 8
          %s1580 = scalar_lea.hbm %s20, %s1579
          %s1582 = sshll.u32 %s1567, 4
          %s1583 = int_to_ptr.vmem [resolvable:$true] %s1582
          %s1584 = sshll.u32 %s1580, 4
          %s1585 = int_to_ptr.hbm [resolvable:$true] %s1584
          %1587 = dma.vmem_to_hbm [thread:$0]  %s1583, 128, %s1585, %s1564
        $region140: #{tpu_custom_call.1} parent=99 // pred_fallthru
          _
        // Predicated region
        $region141: #{tpu_custom_call.1} parent=99 // pred_check
          %p1588 = pneg %p545
        $region142: #{tpu_custom_call.1} parent=99 // pred_check_branch
          %1590 = sbr.rel (%p1588) target = $region144
        $region143: #{tpu_custom_call.1} parent=99 // pred_region
          %1592 = vsyncadd %s1569, 0
          %s1593 = smul.addr %s52, 4
          %s1594 = sadd.s32 %s53, %s1593
          %s1595 = smul.addr %s1594, 4
          %s1596 = scalar_lea.hbm %s21, %s1595
          %s1597 = sshll.u32 %s1572, 4
          %s1598 = int_to_ptr.vmem [resolvable:$true] %s1597
          %s1599 = sshll.u32 %s1596, 4
          %s1600 = int_to_ptr.hbm [resolvable:$true] %s1599
          %1605 = dma.vmem_to_hbm [thread:$0]  %s1598, 256, %s1600, %s1569, 64, 64, 4
        $region144: #{tpu_custom_call.1} parent=99 // pred_fallthru
          _
      $region100: #{tpu_custom_call.1} parent=5 // pred_fallthru
        _
      %p1606 = scmp.le.s32.totalorder 2, %s43
      // Predicated region
      $region145: #{tpu_custom_call.1} parent=5 // pred_check
        %p1607 = pneg %p1606
      $region146: #{tpu_custom_call.1} parent=5 // pred_check_branch
        %1609 = sbr.rel (%p1607) target = $region148
      $region147: #{tpu_custom_call.1} parent=5 // pred_region
        %s1610 = ssub.s32 %s43, 2
        // Predicated region
        $region149: #{tpu_custom_call.1} parent=147 // pred_check
          %p1611 = pneg %p523
        $region150: #{tpu_custom_call.1} parent=147 // pred_check_branch
          %1613 = sbr.rel (%p1611) target = $region152
        $region151: #{tpu_custom_call.1} parent=147 // pred_region
          %s1614 = sand.u32 %s508, 1
          %s1615 = scalar_lea.sflag [#allocation6], %s1614
          %s1616 = sand.u32 %s508, 1
          %s1617 = smul.addr %s1616, 8
          %s1618 = scalar_lea.vmem [#allocation18], %s1617
          %1620 = dma.done %s1615, 128
        $region152: #{tpu_custom_call.1} parent=147 // pred_fallthru
          _
        // Predicated region
        $region153: #{tpu_custom_call.1} parent=147 // pred_check
          %p1621 = pneg %p551
        $region154: #{tpu_custom_call.1} parent=147 // pred_check_branch
          %1623 = sbr.rel (%p1621) target = $region156
        $region155: #{tpu_custom_call.1} parent=147 // pred_region
          %s1624 = sand.u32 %s536, 1
          %s1625 = scalar_lea.sflag [#allocation20], %s1624
          %s1626 = sand.u32 %s536, 1
          %s1627 = smul.addr %s1626, 16
          %s1628 = scalar_lea.vmem [#allocation19], %s1627
          %1630 = dma.done %s1625, 256
        $region156: #{tpu_custom_call.1} parent=147 // pred_fallthru
          _
      $region148: #{tpu_custom_call.1} parent=5 // pred_fallthru
        _
    $region6: #{tpu_custom_call.1} parent=1 // loop_footer
      %s47 = sadd.s32 1, %s43
    $region7: #{tpu_custom_call.1} parent=1 // loop_footer_branch
      %42 = sbr.rel target = $region3
    $region8: #{tpu_custom_call.1} parent=1 // loop_exit
      _
    %1631 = vsyncpa [#allocation5], 1
    %s1632 = scalar_lea.sflag [#allocation5], 1
    %1633 = vsyncpa %s1632, 1
    %1634 = vsyncpa [#allocation8], 1
    %s1635 = scalar_lea.sflag [#allocation8], 1
    %1636 = vsyncpa %s1635, 1
    %1637 = vsyncpa [#allocation11], 1
    %1638 = vsyncpa [#allocation14], 1
    %1639 = vsyncpa [#allocation17], 1
    %1640 = vsyncpa [#allocation6], 1
    %s1641 = scalar_lea.sflag [#allocation6], 1
    %1642 = vsyncpa %s1641, 1
    %1643 = vsyncpa [#allocation20], 1
    %s1644 = scalar_lea.sflag [#allocation20], 1
    %1645 = vsyncpa %s1644, 1

</llo_original>
